<compile_context>
chip_gen: v5e
topology: v5e:2x2
jax: 0.10.0
libtpu: 0.0.40
codegen_flags: <defaults>
</compile_context>

<pallas_src>
import functools
import math

import jax
import jax.numpy as jnp
import numpy as np
from jax.experimental import pallas as pl
from jax.experimental.pallas import tpu as pltpu


# ---------------------------------------------------------------------------
# Host-side parameter setup (same math as torchaudio melscale_fbanks/create_dct)
# ---------------------------------------------------------------------------
def _hz_to_mel(freq, mel_scale="htk"):
    if mel_scale == "htk":
        return 2595.0 * math.log10(1.0 + freq / 700.0)
    f_min, f_sp = 0.0, 200.0 / 3
    mels = (freq - f_min) / f_sp
    min_log_hz = 1000.0
    min_log_mel = (min_log_hz - f_min) / f_sp
    logstep = math.log(6.4) / 27.0
    if freq >= min_log_hz:
        mels = min_log_mel + math.log(freq / min_log_hz) / logstep
    return mels


def _mel_to_hz(mels, mel_scale="htk"):
    if mel_scale == "htk":
        return 700.0 * (10.0 ** (mels / 2595.0) - 1.0)
    f_min, f_sp = 0.0, 200.0 / 3
    freqs = f_min + f_sp * mels
    min_log_hz = 1000.0
    min_log_mel = (min_log_hz - f_min) / f_sp
    logstep = math.log(6.4) / 27.0
    log_t = mels >= min_log_mel
    return np.where(log_t, min_log_hz * np.exp(logstep * (mels - min_log_mel)), freqs)


def melscale_fbanks(n_freqs, f_min, f_max, n_mels, sample_rate, norm=None,
                    mel_scale="htk"):
    all_freqs = np.linspace(0.0, sample_rate // 2, n_freqs)
    m_min = _hz_to_mel(f_min, mel_scale)
    m_max = _hz_to_mel(f_max, mel_scale)
    m_pts = np.linspace(m_min, m_max, n_mels + 2)
    f_pts = _mel_to_hz(m_pts, mel_scale)
    f_diff = f_pts[1:] - f_pts[:-1]
    slopes = f_pts[None, :] - all_freqs[:, None]
    down = (-1.0 * slopes[:, :-2]) / f_diff[:-1]
    up = slopes[:, 2:] / f_diff[1:]
    fb = np.maximum(0.0, np.minimum(down, up))
    if norm == "slaney":
        enorm = 2.0 / (f_pts[2:n_mels + 2] - f_pts[:n_mels])
        fb = fb * enorm[None, :]
    return fb.astype(np.float32)                       # (n_freqs, n_mels)


def create_dct_t(n_mfcc, n_mels, norm="ortho"):
    """Returns DCT^T of shape (n_mfcc, n_mels) == torchaudio F.create_dct(...).T."""
    n = np.arange(n_mels, dtype=np.float64)
    k = np.arange(n_mfcc, dtype=np.float64)[:, None]
    dct = np.cos(math.pi / float(n_mels) * (n + 0.5) * k)   # (n_mfcc, n_mels)
    if norm is None:
        dct *= 2.0
    else:
        assert norm == "ortho"
        dct[0] *= 1.0 / math.sqrt(2.0)
        dct *= math.sqrt(2.0 / float(n_mels))
    return dct.astype(np.float32)


def _hann_window(win_length):
    n = np.arange(win_length)
    return (0.5 - 0.5 * np.cos(2.0 * math.pi * n / win_length)).astype(np.float32)


def _dft_matrices(window_full, n_fft, hop):
    """Windowed real-DFT matrices split per hop-chunk.

    Returns (cos_m, sin_m) each of shape (Q, hop, F) with Q = n_fft // hop,
    F = n_fft // 2 + 1 so that frame DFT = sum_q X[:, t+q, :] @ W[q]."""
    n_freqs = n_fft // 2 + 1
    q_count = n_fft // hop
    n = np.arange(n_fft, dtype=np.float64)[:, None]
    f = np.arange(n_freqs, dtype=np.float64)[None, :]
    ang = 2.0 * math.pi * n * f / float(n_fft)
    w = window_full.astype(np.float64)[:, None]
    cos_m = (w * np.cos(ang)).astype(np.float32).reshape(q_count, hop, n_freqs)
    sin_m = (-(w * np.sin(ang))).astype(np.float32).reshape(q_count, hop, n_freqs)
    return cos_m, sin_m


# ---------------------------------------------------------------------------
# Spectrogram glue.
# TODO(synk): rFFT / STFT has no in-kernel Pallas TPU primitive; the framing +
# DFT run as JAX ops (DFT-as-matmul fast path, gather+rfft fallback/reference).
# ---------------------------------------------------------------------------
def _spectrogram_reference(waveform, window, n_fft, hop_length, win_length,
                           power, normalized, center, pad, pad_mode):
    """Gather-based framing + rFFT (reference / fallback path)."""
    x = waveform.astype(jnp.float32)
    if pad > 0:
        x = jnp.pad(x, ((0, 0), (pad, pad)))
    w = window
    if win_length < n_fft:
        left = (n_fft - win_length) // 2
        w = jnp.pad(w, (left, n_fft - win_length - left))
    if center:
        half = n_fft // 2
        x = jnp.pad(x, ((0, 0), (half, half)), mode=pad_mode)
    n_frames = 1 + (x.shape[-1] - n_fft) // hop_length
    idx = (jnp.arange(n_frames)[:, None] * hop_length
           + jnp.arange(n_fft)[None, :])
    frames = x[:, idx] * w[None, None, :]               # (B, T, n_fft)
    z = jnp.fft.rfft(frames, axis=-1)                   # (B, T, n_freqs)
    if normalized:
        z = z / jnp.sqrt(jnp.sum(w ** 2))
    spec = z.real ** 2 + z.imag ** 2
    if power != 2.0:
        spec = spec ** (power / 2.0)
    return jnp.swapaxes(spec, -1, -2)                   # (B, n_freqs, T)


def _spectrogram_matmul(waveform, cos_m, sin_m, n_fft, hop_length, power,
                        normalized, center, pad, pad_mode, win_sumsq,
                        out_dtype=jnp.float32):
    """Gather-free STFT: non-overlapping reshape + windowed DFT as matmuls."""
    x = waveform.astype(jnp.float32)
    if pad > 0:
        x = jnp.pad(x, ((0, 0), (pad, pad)))
    if center:
        half = n_fft // 2
        x = jnp.pad(x, ((0, 0), (half, half)), mode=pad_mode)
    batch, padded_len = x.shape
    n_frames = 1 + (padded_len - n_fft) // hop_length
    q_count, hop, n_freqs = cos_m.shape
    n_chunks = n_frames + q_count - 1
    x = x[:, : n_chunks * hop]
    xc = x.reshape(batch, n_chunks, hop)
    re = jnp.zeros((batch, n_frames, n_freqs), jnp.float32)
    im = jnp.zeros((batch, n_frames, n_freqs), jnp.float32)
    for q in range(q_count):
        xq = jax.lax.slice_in_dim(xc, q, q + n_frames, axis=1)   # (B, T, hop)
        re = re + jnp.einsum("btr,rf->btf", xq, cos_m[q], precision="highest")
        im = im + jnp.einsum("btr,rf->btf", xq, sin_m[q], precision="highest")
    if normalized:
        scale = np.float32(1.0 / math.sqrt(win_sumsq))
        re = re * scale
        im = im * scale
    spec = re * re + im * im
    if power != 2.0:
        spec = spec ** (power / 2.0)
    return jnp.swapaxes(spec, -1, -2).astype(out_dtype)  # (B, n_freqs, T)


# ---------------------------------------------------------------------------
# Pallas kernels
# ---------------------------------------------------------------------------
def _mel_colmax_kernel(fbt_ref, spec_ref, mx_ref, *, t_total):
    # fbt_ref: (n_mels, n_freqs)   spec_ref: (n_freqs, TT)   mx_ref: (1, TT)
    mel = jnp.dot(fbt_ref[...], spec_ref[...], preferred_element_type=jnp.float32)
    tt = mel.shape[1]
    col = jax.lax.broadcasted_iota(jnp.int32, (1, tt), 1) + pl.program_id(1) * tt
    masked = jnp.where(col < t_total, mel, -jnp.inf)     # mask ragged last tile
    mx_ref[...] = jnp.max(masked, axis=0, keepdims=True)


def _mfcc_kernel(fbt_ref, dctt_ref, spec_ref, floor_ref, out_ref, *,
                 log_mels, apply_floor, multiplier, amin, db_multiplier):
    # fbt_ref: (n_mels, n_freqs)  dctt_ref: (n_mfcc, n_mels)  spec_ref: (n_freqs, TT)
    # floor_ref: SMEM (1,) f32    out_ref: (n_mfcc, TT)
    mel = jnp.dot(fbt_ref[...], spec_ref[...], preferred_element_type=jnp.float32)
    if log_mels:
        db = jnp.log(mel + np.float32(1e-6))
    else:
        inv_ln10 = np.float32(1.0 / math.log(10.0))
        db = np.float32(multiplier) * (jnp.log(jnp.maximum(mel, np.float32(amin)))
                                       * inv_ln10)
        db = db - np.float32(multiplier * db_multiplier)
        if apply_floor:
            db = jnp.maximum(db, floor_ref[0])
    out_ref[...] = jnp.dot(dctt_ref[...], db,
                           preferred_element_type=jnp.float32).astype(out_ref.dtype)


def _round_up(x, m):
    return ((x + m - 1) // m) * m


def _pick_time_tile(total_t, batch, tile_t):
    if total_t <= 128:
        return total_t                                  # full-extent lane block
    cap = max(128, (int(tile_t) // 128) * 128)
    tt = min(cap, _round_up(total_t, 128))
    if batch == 1 and total_t > 1024:
        # Guarantee >= 2 grid steps so both v7x TensorCores get work, but never
        # shrink the tile below 1024.
        tt = min(tt, max(1024, _round_up((total_t + 1) // 2, 128)))
    return tt


def mfcc_from_spec(spec, fb_t, dct_t, *, multiplier, amin, db_multiplier,
                   top_db, log_mels, compute_dtype=jnp.bfloat16, tile_t=4096,
                   out_dtype=jnp.float32):
    """spec: (B, n_freqs, T) power spectrogram -> MFCC (B, n_mfcc, T)."""
    B, F, T = spec.shape
    M = fb_t.shape[0]
    C = dct_t.shape[0]

    spec_c = spec if spec.dtype == compute_dtype else spec.astype(compute_dtype)
    fb_c = fb_t if fb_t.dtype == compute_dtype else fb_t.astype(compute_dtype)
    dct_c = dct_t if dct_t.dtype == jnp.float32 else dct_t.astype(jnp.float32)

    TT = _pick_time_tile(T, B, tile_t)
    nT = -(-T // TT)
    grid = (B, nT)
    params = pltpu.CompilerParams(
        dimension_semantics=("parallel", "parallel"),
        vmem_limit_bytes=64 * 1024 * 1024)

    apply_floor = (not log_mels) and (top_db is not None)
    if apply_floor:
        # Kernel A: per-column mel max only (no mel-dB intermediate in HBM).
        colmax = pl.pallas_call(
            functools.partial(_mel_colmax_kernel, t_total=T),
            out_shape=jax.ShapeDtypeStruct((B, 1, T), jnp.float32),
            grid_spec=pltpu.PrefetchScalarGridSpec(
                num_scalar_prefetch=0,
                grid=grid,
                in_specs=[
                    pl.BlockSpec((M, F), lambda b, t: (0, 0)),
                    pl.BlockSpec((pl.Squeezed(), F, TT), lambda b, t: (b, 0, t)),
                ],
                out_specs=pl.BlockSpec((pl.Squeezed(), 1, TT),
                                       lambda b, t: (b, 0, t)),
            ),
            compiler_params=params,
        )(fb_c, spec_c)
        # Global top_db floor.  dB is monotone in mel, so derive it from max(mel)
        # (this is the only cross-tile dependency; computed in tiny glue).
        max_mel = jnp.maximum(jnp.max(colmax), jnp.float32(amin))
        max_db = multiplier * jnp.log10(max_mel) - multiplier * db_multiplier
        floor = jnp.reshape(max_db - jnp.float32(top_db), (1,)).astype(jnp.float32)
    else:
        floor = jnp.zeros((1,), jnp.float32)            # unused by the kernel

    # Kernel B: (recomputed) mel matmul + dB + clamp + DCT, fused per time tile.
    kernel = functools.partial(
        _mfcc_kernel, log_mels=log_mels, apply_floor=apply_floor,
        multiplier=multiplier, amin=amin, db_multiplier=db_multiplier)
    return pl.pallas_call(
        kernel,
        out_shape=jax.ShapeDtypeStruct((B, C, T), out_dtype),
        grid_spec=pltpu.PrefetchScalarGridSpec(
            num_scalar_prefetch=0,
            grid=grid,
            in_specs=[
                pl.BlockSpec((M, F), lambda b, t: (0, 0)),    # fb^T, VMEM-resident
                pl.BlockSpec((C, M), lambda b, t: (0, 0)),    # DCT^T, VMEM-resident
                pl.BlockSpec((pl.Squeezed(), F, TT), lambda b, t: (b, 0, t)),
                pl.BlockSpec(memory_space=pltpu.MemorySpace.SMEM),  # scalar floor
            ],
            out_specs=pl.BlockSpec((pl.Squeezed(), C, TT), lambda b, t: (b, 0, t)),
        ),
        compiler_params=params,
    )(fb_c, dct_c, spec_c, floor)


# ---------------------------------------------------------------------------
# MFCC "module": holds buffers, forward = STFT glue + Pallas kernels.
# ---------------------------------------------------------------------------
class MFCC:
    def __init__(self, sample_rate=16000, n_mfcc=40, dct_type=2, norm="ortho",
                 log_mels=False, melkwargs=None, compute_dtype=jnp.bfloat16,
                 tile_t=4096):
        if dct_type != 2:
            raise ValueError("DCT type not supported: {}".format(dct_type))
        melkwargs = dict(melkwargs or {})
        self.sample_rate = sample_rate
        self.n_mfcc = n_mfcc
        self.log_mels = log_mels
        self.compute_dtype = compute_dtype
        self.tile_t = tile_t

        # MelSpectrogram parameters (torchaudio defaults).
        self.n_fft = melkwargs.get("n_fft", 400)
        self.win_length = melkwargs.get("win_length") or self.n_fft
        self.hop_length = melkwargs.get("hop_length") or self.win_length // 2
        self.f_min = melkwargs.get("f_min", 0.0)
        f_max = melkwargs.get("f_max", None)
        self.f_max = f_max if f_max is not None else float(sample_rate // 2)
        self.pad = melkwargs.get("pad", 0)
        self.n_mels = melkwargs.get("n_mels", 128)
        self.power = melkwargs.get("power", 2.0)
        self.normalized = melkwargs.get("normalized", False)
        self.center = melkwargs.get("center", True)
        self.pad_mode = melkwargs.get("pad_mode", "reflect")
        mel_norm = melkwargs.get("norm", None)
        mel_scale = melkwargs.get("mel_scale", "htk")
        if self.n_mfcc > self.n_mels:
            raise ValueError("Cannot select more MFCC coefficients than # mel bins")

        # AmplitudeToDB('power', top_db=80.0)
        self.top_db = 80.0
        self.multiplier = 10.0
        self.amin = 1e-10
        self.ref_value = 1.0
        self.db_multiplier = math.log10(max(self.amin, self.ref_value))

        n_stft = self.n_fft // 2 + 1
        fb = melscale_fbanks(n_stft, self.f_min, self.f_max, self.n_mels,
                             sample_rate, mel_norm, mel_scale)   # (F, M)
        dct_t = create_dct_t(n_mfcc, self.n_mels, norm)          # (C, M)

        # f32 buffers (parity with the torch module, used by the reference).
        self.fb = jnp.asarray(fb, dtype=jnp.float32)             # (n_freqs, n_mels)
        self.dct_mat = jnp.asarray(dct_t.T, dtype=jnp.float32)   # (n_mels, n_mfcc)
        # Hoisted transposes + compute-dtype cast (done once, not per call).
        self.fb_t = jnp.asarray(fb.T, dtype=compute_dtype)       # (n_mels, n_freqs)
        self.dct_t = jnp.asarray(dct_t, dtype=jnp.float32)       # (n_mfcc, n_mels)

        # Window + gather-free DFT framing matrices.
        win = _hann_window(self.win_length)
        if self.win_length < self.n_fft:
            left = (self.n_fft - self.win_length) // 2
            win_full = np.pad(win, (left, self.n_fft - self.win_length - left))
        else:
            win_full = win
        self.window = jnp.asarray(win, dtype=jnp.float32)
        self._win_sumsq = float(np.sum(win_full.astype(np.float64) ** 2))
        self._use_matmul_stft = (self.n_fft % self.hop_length == 0)
        if self._use_matmul_stft:
            cos_m, sin_m = _dft_matrices(win_full, self.n_fft, self.hop_length)
            self._dft_cos = jnp.asarray(cos_m)                   # (Q, hop, F)
            self._dft_sin = jnp.asarray(sin_m)

        self._jit_forward = jax.jit(self._forward)

    def _forward(self, waveform):
        if self._use_matmul_stft:
            spec = _spectrogram_matmul(
                waveform, self._dft_cos, self._dft_sin, self.n_fft,
                self.hop_length, self.power, self.normalized, self.center,
                self.pad, self.pad_mode, self._win_sumsq,
                out_dtype=self.compute_dtype)
        else:
            # TODO(synk): fallback framing still uses a gather + rFFT (no clean
            # Pallas equivalent when hop does not divide n_fft).
            spec = _spectrogram_reference(
                waveform, self.window, self.n_fft, self.hop_length,
                self.win_length, self.power, self.normalized, self.center,
                self.pad, self.pad_mode).astype(self.compute_dtype)
        return mfcc_from_spec(
            spec, self.fb_t, self.dct_t,
            multiplier=self.multiplier, amin=self.amin,
            db_multiplier=self.db_multiplier, top_db=self.top_db,
            log_mels=self.log_mels, compute_dtype=self.compute_dtype,
            tile_t=self.tile_t, out_dtype=jnp.float32)

    def __call__(self, waveform):
        if waveform.ndim == 1:
            waveform = waveform[None, :]
        return self._jit_forward(waveform)


# ---------------------------------------------------------------------------
# Pure-JAX reference of the PyTorch forward semantics (gather + rFFT STFT,
# precision='highest' matmuls, global top_db clamp).
# ---------------------------------------------------------------------------
def mfcc_reference(mod, waveform):
    if waveform.ndim == 1:
        waveform = waveform[None, :]
    spec = _spectrogram_reference(waveform, mod.window, mod.n_fft, mod.hop_length,
                                  mod.win_length, mod.power, mod.normalized,
                                  mod.center, mod.pad, mod.pad_mode)
    mel = jnp.swapaxes(
        jnp.matmul(jnp.swapaxes(spec, -1, -2), mod.fb, precision="highest"), -1, -2)
    if mod.log_mels:
        db = jnp.log(mel + 1e-6)
    else:
        db = mod.multiplier * jnp.log10(jnp.maximum(mel, mod.amin))
        db = db - mod.multiplier * mod.db_multiplier
        if mod.top_db is not None:
            db = jnp.maximum(db, jnp.max(db) - mod.top_db)
    return jnp.swapaxes(
        jnp.matmul(jnp.swapaxes(db, -1, -2), mod.dct_mat, precision="highest"),
        -1, -2)


if __name__ == "__main__":
    key = jax.random.PRNGKey(0)
    k1, k2 = jax.random.split(key)

    # Small deterministic example: 2 waveforms of 4000 samples ->
    # 21 STFT frames (n_fft=400, hop=200), n_mels=128, n_mfcc=40 (defaults).
    B, L = 2, 4000
    waveform = jax.random.uniform(k1, (B, L), dtype=jnp.float32,
                                  minval=-1.0, maxval=1.0)

    # Default module: bf16 spectrogram stream, f32 MXU accumulation.
    mod = MFCC()
    out = jax.block_until_ready(mod(waveform))
    n_frames = 1 + L // mod.hop_length
    assert out.shape == (B, mod.n_mfcc, n_frames), out.shape
    ref = jax.block_until_ready(mfcc_reference(mod, waveform))
    np.testing.assert_allclose(np.asarray(out), np.asarray(ref),
                               rtol=5e-2, atol=2.0)

    # f32 compute path: tighter parity with the torchaudio math.
    mod_f32 = MFCC(compute_dtype=jnp.float32)
    out_f32 = jax.block_until_ready(mod_f32(waveform))
    np.testing.assert_allclose(np.asarray(out_f32), np.asarray(ref),
                               rtol=1e-2, atol=0.5)

    # Long mono clip: multi-tile time grid, ragged last tile, B==1 tile split.
    L_long = 16 * 16000 + 37
    wave_long = jax.random.uniform(k2, (1, L_long), dtype=jnp.float32,
                                   minval=-1.0, maxval=1.0)
    out_long = jax.block_until_ready(mod_f32(wave_long))
    ref_long = jax.block_until_ready(mfcc_reference(mod_f32, wave_long))
    n_frames_long = 1 + L_long // mod_f32.hop_length
    assert out_long.shape == (1, mod_f32.n_mfcc, n_frames_long), out_long.shape
    np.testing.assert_allclose(np.asarray(out_long), np.asarray(ref_long),
                               rtol=1e-2, atol=0.5)

    # log_mels path: single fused kernel (no colmax / floor clamp).
    mod_log = MFCC(log_mels=True, compute_dtype=jnp.float32)
    out_log = jax.block_until_ready(mod_log(waveform))
    ref_log = jax.block_until_ready(mfcc_reference(mod_log, waveform))
    np.testing.assert_allclose(np.asarray(out_log), np.asarray(ref_log),
                               rtol=1e-2, atol=0.5)

    print("KERNEL_OK")
</pallas_src>

<mosaic_0001>
module attributes {stable_mosaic.version = 11 : i64} {
  func.func @_mel_colmax_kernel(%arg0: i32, %arg1: i32, %arg2: memref<128x201xbf16, #tpu.memory_space<vmem>>, %arg3: memref<1x201x21xbf16, #tpu.memory_space<vmem>>, %arg4: memref<1x1x21xf32, #tpu.memory_space<vmem>>) attributes {dimension_semantics = [#tpu.dimension_semantics<parallel>, #tpu.dimension_semantics<parallel>], iteration_bounds = array<i64: 2, 1>, scalar_prefetch = 0 : i64, scratch_operands = 0 : i64, tpu.core_type = #tpu.core_type<tc>, window_params = [{pipeline_mode = #tpu.pipeline_mode<synchronous>, transform_indices = @transform_0, window_bounds = array<i64: 128, 201>}, {transform_indices = @transform_1, window_bounds = array<i64: 1, 201, 21>}, {transform_indices = @transform_2, window_bounds = array<i64: 1, 1, 21>}]} {
    %c0 = arith.constant 0 : index
    %c0_0 = arith.constant 0 : index
    %0 = vector.load %arg2[%c0, %c0_0] : memref<128x201xbf16, #tpu.memory_space<vmem>>, vector<128x201xbf16>
    %c0_1 = arith.constant 0 : index
    %c0_2 = arith.constant 0 : index
    %c0_3 = arith.constant 0 : index
    %1 = vector.load %arg3[%c0_1, %c0_2, %c0_3] : memref<1x201x21xbf16, #tpu.memory_space<vmem>>, vector<1x201x21xbf16>
    %2 = vector.shape_cast %1 : vector<1x201x21xbf16> to vector<201x21xbf16>
    %cst = arith.constant dense<0.000000e+00> : vector<128x21xf32>
    %3 = tpu.matmul %0, %2, %cst {dimension_numbers = #tpu.dot_dimension_numbers<[1], [0], [0], [1], [0, 0, 1, 1], [], []>} : vector<128x201xbf16>, vector<201x21xbf16>, vector<128x21xf32> -> vector<128x21xf32>
    %4 = tpu.iota {dimensions = array<i32: 1>} : vector<1x21xi32>
    %c21_i32 = arith.constant 21 : i32
    %5 = arith.muli %arg1, %c21_i32 : i32
    %6 = vector.broadcast %5 : i32 to vector<1x21xi32>
    %7 = arith.addi %4, %6 : vector<1x21xi32>
    %c21_i32_4 = arith.constant 21 : i32
    %8 = vector.broadcast %c21_i32_4 : i32 to vector<1x21xi32>
    %9 = arith.cmpi slt, %7, %8 : vector<1x21xi32>
    %cst_5 = arith.constant 0xFF800000 : f32
    %10 = vector.shape_cast %9 : vector<1x21xi1> to vector<1x21xi1>
    %11 = vector.broadcast %10 : vector<1x21xi1> to vector<128x21xi1>
    %12 = vector.broadcast %cst_5 : f32 to vector<128x21xf32>
    %13 = arith.select %11, %3, %12 : vector<128x21xi1>, vector<128x21xf32>
    %cst_6 = arith.constant dense<0xFF800000> : vector<21xf32>
    %14 = vector.multi_reduction <maximumf>, %13, %cst_6 [0] : vector<128x21xf32> to vector<21xf32>
    %15 = vector.shape_cast %14 : vector<21xf32> to vector<1x21xf32>
    %c0_7 = arith.constant 0 : index
    %c0_8 = arith.constant 0 : index
    %c0_9 = arith.constant 0 : index
    %16 = vector.load %arg4[%c0_7, %c0_8, %c0_9] : memref<1x1x21xf32, #tpu.memory_space<vmem>>, vector<1x1x21xf32>
    %17 = vector.shape_cast %16 : vector<1x1x21xf32> to vector<1x21xf32>
    %18 = vector.shape_cast %15 : vector<1x21xf32> to vector<1x1x21xf32>
    tpu.vector_store %arg4[%c0_7, %c0_8, %c0_9], %18 {strides = array<i32>} : memref<1x1x21xf32, #tpu.memory_space<vmem>>, vector<1x1x21xf32>,
    return
  }
  func.func @transform_0(%arg0: i32, %arg1: i32) -> (i32, i32) {
    %c0_i32 = arith.constant 0 : i32
    %c0_i32_0 = arith.constant 0 : i32
    %c0_i32_1 = arith.constant 0 : i32
    return %c0_i32, %c0_i32_0 : i32, i32
  }
  func.func @transform_1(%arg0: i32, %arg1: i32) -> (i32, i32, i32) {
    %c0_i32 = arith.constant 0 : i32
    %c0_i32_0 = arith.constant 0 : i32
    return %arg0, %c0_i32, %arg1 : i32, i32, i32
  }
  func.func @transform_2(%arg0: i32, %arg1: i32) -> (i32, i32, i32) {
    %c0_i32 = arith.constant 0 : i32
    %c0_i32_0 = arith.constant 0 : i32
    return %arg0, %c0_i32, %arg1 : i32, i32, i32
  }
}

module attributes {stable_mosaic.version = 11 : i64} {
  func.func @_mfcc_kernel(%arg0: i32, %arg1: i32, %arg2: memref<128x201xbf16, #tpu.memory_space<vmem>>, %arg3: memref<40x128xf32, #tpu.memory_space<vmem>>, %arg4: memref<1x201x21xbf16, #tpu.memory_space<vmem>>, %arg5: memref<1xf32, #tpu.memory_space<smem>>, %arg6: memref<1x40x21xf32, #tpu.memory_space<vmem>>) attributes {dimension_semantics = [#tpu.dimension_semantics<parallel>, #tpu.dimension_semantics<parallel>], iteration_bounds = array<i64: 2, 1>, scalar_prefetch = 0 : i64, scratch_operands = 0 : i64, tpu.core_type = #tpu.core_type<tc>, window_params = [{pipeline_mode = #tpu.pipeline_mode<synchronous>, transform_indices = @transform_0, window_bounds = array<i64: 128, 201>}, {pipeline_mode = #tpu.pipeline_mode<synchronous>, transform_indices = @transform_1, window_bounds = array<i64: 40, 128>}, {transform_indices = @transform_2, window_bounds = array<i64: 1, 201, 21>}, {transform_indices = @transform_3, window_bounds = array<i64: 1>}, {transform_indices = @transform_4, window_bounds = array<i64: 1, 40, 21>}]} {
    %c0 = arith.constant 0 : index
    %c0_0 = arith.constant 0 : index
    %0 = vector.load %arg2[%c0, %c0_0] : memref<128x201xbf16, #tpu.memory_space<vmem>>, vector<128x201xbf16>
    %c0_1 = arith.constant 0 : index
    %c0_2 = arith.constant 0 : index
    %c0_3 = arith.constant 0 : index
    %1 = vector.load %arg4[%c0_1, %c0_2, %c0_3] : memref<1x201x21xbf16, #tpu.memory_space<vmem>>, vector<1x201x21xbf16>
    %2 = vector.shape_cast %1 : vector<1x201x21xbf16> to vector<201x21xbf16>
    %cst = arith.constant dense<0.000000e+00> : vector<128x21xf32>
    %3 = tpu.matmul %0, %2, %cst {dimension_numbers = #tpu.dot_dimension_numbers<[1], [0], [0], [1], [0, 0, 1, 1], [], []>} : vector<128x201xbf16>, vector<201x21xbf16>, vector<128x21xf32> -> vector<128x21xf32>
    %cst_4 = arith.constant 1.000000e-10 : f32
    %4 = vector.broadcast %cst_4 : f32 to vector<128x21xf32>
    %5 = arith.maximumf %3, %4 : vector<128x21xf32>
    %6 = math.log %5 : vector<128x21xf32>
    %cst_5 = arith.constant 0.434294492 : f32
    %7 = vector.broadcast %cst_5 : f32 to vector<128x21xf32>
    %8 = arith.mulf %6, %7 : vector<128x21xf32>
    %cst_6 = arith.constant 1.000000e+01 : f32
    %9 = vector.broadcast %cst_6 : f32 to vector<128x21xf32>
    %10 = arith.mulf %9, %8 : vector<128x21xf32>
    %cst_7 = arith.constant 0.000000e+00 : f32
    %11 = vector.broadcast %cst_7 : f32 to vector<128x21xf32>
    %12 = arith.subf %10, %11 : vector<128x21xf32>
    %c0_8 = arith.constant 0 : index
    %13 = memref.load %arg5[%c0_8] : memref<1xf32, #tpu.memory_space<smem>>
    %14 = vector.broadcast %13 : f32 to vector<128x21xf32>
    %15 = arith.maximumf %12, %14 : vector<128x21xf32>
    %c0_9 = arith.constant 0 : index
    %c0_10 = arith.constant 0 : index
    %16 = vector.load %arg3[%c0_9, %c0_10] : memref<40x128xf32, #tpu.memory_space<vmem>>, vector<40x128xf32>
    %cst_11 = arith.constant dense<0.000000e+00> : vector<40x21xf32>
    %17 = tpu.matmul %16, %15, %cst_11 {dimension_numbers = #tpu.dot_dimension_numbers<[1], [0], [0], [1], [0, 0, 1, 1], [], []>} : vector<40x128xf32>, vector<128x21xf32>, vector<40x21xf32> -> vector<40x21xf32>
    %c0_12 = arith.constant 0 : index
    %c0_13 = arith.constant 0 : index
    %c0_14 = arith.constant 0 : index
    %18 = vector.load %arg6[%c0_12, %c0_13, %c0_14] : memref<1x40x21xf32, #tpu.memory_space<vmem>>, vector<1x40x21xf32>
    %19 = vector.shape_cast %18 : vector<1x40x21xf32> to vector<40x21xf32>
    %20 = vector.shape_cast %17 : vector<40x21xf32> to vector<1x40x21xf32>
    tpu.vector_store %arg6[%c0_12, %c0_13, %c0_14], %20 {strides = array<i32>} : memref<1x40x21xf32, #tpu.memory_space<vmem>>, vector<1x40x21xf32>,
    return
  }
  func.func @transform_0(%arg0: i32, %arg1: i32) -> (i32, i32) {
    %c0_i32 = arith.constant 0 : i32
    %c0_i32_0 = arith.constant 0 : i32
    %c0_i32_1 = arith.constant 0 : i32
    return %c0_i32, %c0_i32_0 : i32, i32
  }
  func.func @transform_1(%arg0: i32, %arg1: i32) -> (i32, i32) {
    %c0_i32 = arith.constant 0 : i32
    %c0_i32_0 = arith.constant 0 : i32
    %c0_i32_1 = arith.constant 0 : i32
    return %c0_i32, %c0_i32_0 : i32, i32
  }
  func.func @transform_2(%arg0: i32, %arg1: i32) -> (i32, i32, i32) {
    %c0_i32 = arith.constant 0 : i32
    %c0_i32_0 = arith.constant 0 : i32
    return %arg0, %c0_i32, %arg1 : i32, i32, i32
  }
  func.func @transform_3(%arg0: i32, %arg1: i32) -> i32 {
    %c0_i32 = arith.constant 0 : i32
    %c0_i32_0 = arith.constant 0 : i32
    return %c0_i32 : i32
  }
  func.func @transform_4(%arg0: i32, %arg1: i32) -> (i32, i32, i32) {
    %c0_i32 = arith.constant 0 : i32
    %c0_i32_0 = arith.constant 0 : i32
    return %arg0, %c0_i32, %arg1 : i32, i32, i32
  }
}

</mosaic_0001>

<llo_original>
// kernel: reverse.1
$region0: #{reverse.1}
  %s0 = inlined_call_operand.vmem [shape: f32[2,256], index: 0, kind: input, shape index: {}]
  %s1 = inlined_call_operand.vmem [shape: f32[2,256], index: 1, kind: output, shape index: {}]
  %v2 = vlaneseq
  %v3 = vsub.s32 127, %v2
  %4 = vset.pattern.permute.xlu0 %v3
  $region1: #{reverse.1} parent=0
    #allocation0 [shape = 'u8[4096]{0}', space=vmem, size = 0x1000, scoped, tag = 'operand span for operand 0']
    #allocation1 [shape = 'u8[2048]{0}', space=vmem, size = 0x800, scoped, tag = 'packed  for operand 0']
    #allocation2 [shape = 'u8[4096]{0}', space=vmem, size = 0x1000, scoped, tag = 'operand span for operand 1']
    #allocation3 [shape = 'u8[2048]{0}', space=vmem, size = 0x800, scoped, tag = 'packed  for operand 1']
    loop: start=0, step=1, limit=4
    $region2: #{reverse.1} parent=1 // loop_pre_header
      _
    $region3: #{reverse.1} parent=1 // loop_header
      %s6 = sphi 0, %s10
      %p7 = scmp.ge.s32.totalorder %s6, 4
      %s13 = sphi 0, %s25
      %s14 = sphi 0, %s21
      %s15 = sphi 0, %s13
      %s16 = sphi 0, %s14
      %s17 = sphi 0, %s15
      %s18 = sphi 0, %s16
    $region4: #{reverse.1} parent=1 // loop_header_branch
      %9 = sbr.rel (%p7) target = $region8
    $region5: #{reverse.1} parent=1 // loop_body
      %s11 = ssub.s32 %s6, 1
      %s12 = ssub.s32 %s6, 2
      %s19 = sadd.s32 1, %s14
      %p20 = scmp.ge.s32.totalorder %s19, 2
      %s21 = scalar_select %p20, 0, %s19
      %s22 = sadd.s32 1, %s13
      %s23 = scalar_select %p20, %s22, %s13
      %p24 = scmp.ge.s32.totalorder %s23, 1
      %s25 = scalar_select %p24, 0, %s23
      %p26 = scmp.le.s32.totalorder 1, %s6
      %p27 = scmp.lt.s32.totalorder %s6, 3
      %p28 = pnand %p26, %p27
      %p29 = pneg %p28
      // Predicated region
      $region9: #{reverse.1} parent=5 // pred_check
        _
      $region10: #{reverse.1} parent=5 // pred_check_branch
        %31 = sbr.rel (%p28) target = $region12
      $region11: #{reverse.1} parent=5 // pred_region
        %s32 = ssub.s32 %s6, 1
      $region12: #{reverse.1} parent=5 // pred_fallthru
        _
      %p33 = scmp.lt.s32.totalorder %s6, 2
      // Predicated region
      $region13: #{reverse.1} parent=5 // pred_check
        %p34 = pneg %p33
      $region14: #{reverse.1} parent=5 // pred_check_branch
        %36 = sbr.rel (%p34) target = $region16
      $region15: #{reverse.1} parent=5 // pred_region
        %s37 = sand.u32 %s6, 1
        %s38 = sand.u32 %s6, 1
        %s39 = smul.addr %s38, 2
        %s40 = scalar_lea.vmem [#allocation1], %s39
        %s41 = ssub.s32 1, %s14
        %s42 = smul.addr %s13, 2
        %s43 = sadd.s32 %s41, %s42
        %s44 = smul.addr %s43, 2
        %s45 = scalar_lea.vmem %s0, %s44
        // Predicated region
        $region17: #{reverse.1} parent=15 // pred_check
          _
        $region18: #{reverse.1} parent=15 // pred_check_branch
          %47 = sbr.rel (0) target = $region20
        $region19: #{reverse.1} parent=15 // pred_region
          // Predicated region
          $region21: #{reverse.1} parent=19 // pred_check
            _
          $region22: #{reverse.1} parent=19 // pred_check_branch
            %49 = sbr.rel target = $region24
          $region23: #{reverse.1} parent=19 // pred_region
            // Predicated region
            $region36: #{reverse.1} parent=23 // pred_check
              _
            $region37: #{reverse.1} parent=23 // pred_check_branch
              %65 = sbr.rel (0) target = $region39
            $region38: #{reverse.1} parent=23 // pred_region
              %s67 = ssub.s32 4, 1
              loop: start=0, step=1, limit=1
              $region40: #{reverse.1} parent=38 // loop_pre_header
                _
              $region41: #{reverse.1} parent=38 // loop_header
                %s69 = sphi 0, %s73
                %p70 = scmp.ge.s32.totalorder %s69, 1
                %s74 = sphi %s45, %s45
                %s75 = sphi %s40, %s40
              $region42: #{reverse.1} parent=38 // loop_header_branch
                %72 = sbr.rel (%p70) target = $region46
              $region43: #{reverse.1} parent=38 // loop_body
                %v76 = vld [vmem:[%s74] sm:%s67]
                %77 = vst [vmem:[%s75] sm:%s67] %v76
              $region44: #{reverse.1} parent=38 // loop_footer
                %s73 = sadd.s32 1, %s69
              $region45: #{reverse.1} parent=38 // loop_footer_branch
                %68 = sbr.rel target = $region41
              $region46: #{reverse.1} parent=38 // loop_exit
                _
            $region39: #{reverse.1} parent=23 // pred_fallthru
              _
          $region24: #{reverse.1} parent=19 // pred_fallthru
            _
          // Predicated region
          $region25: #{reverse.1} parent=19 // pred_check
            _
          $region26: #{reverse.1} parent=19 // pred_check_branch
            %51 = sbr.rel (0) target = $region28
          $region27: #{reverse.1} parent=19 // pred_region
            %s53 = ssub.s32 4, 1
            loop: start=0, step=1, limit=1
            $region29: #{reverse.1} parent=27 // loop_pre_header
              _
            $region30: #{reverse.1} parent=27 // loop_header
              %s55 = sphi 0, %s59
              %p56 = scmp.ge.s32.totalorder %s55, 1
              %s60 = sphi %s45, %s45
              %s61 = sphi %s40, %s40
            $region31: #{reverse.1} parent=27 // loop_header_branch
              %58 = sbr.rel (%p56) target = $region35
            $region32: #{reverse.1} parent=27 // loop_body
              %v62 = vld [vmem:[%s60] sm:%s53]
              %63 = vst [vmem:[%s61] sm:%s53] %v62
            $region33: #{reverse.1} parent=27 // loop_footer
              %s59 = sadd.s32 1, %s55
            $region34: #{reverse.1} parent=27 // loop_footer_branch
              %54 = sbr.rel target = $region30
            $region35: #{reverse.1} parent=27 // loop_exit
              _
          $region28: #{reverse.1} parent=19 // pred_fallthru
            _
        $region20: #{reverse.1} parent=15 // pred_fallthru
          _
        %78 = vnop
      $region16: #{reverse.1} parent=5 // pred_fallthru
        _
      %p79 = scmp.le.s32.totalorder 1, %s6
      %p80 = scmp.lt.s32.totalorder %s6, 3
      %p81 = pnand %p79, %p80
      %p82 = pneg %p81
      // Predicated region
      $region47: #{reverse.1} parent=5 // pred_check
        _
      $region48: #{reverse.1} parent=5 // pred_check_branch
        %84 = sbr.rel (%p81) target = $region50
      $region49: #{reverse.1} parent=5 // pred_region
        %s85 = ssub.s32 %s6, 1
        %s86 = sand.u32 %s11, 1
        %s87 = sand.u32 %s11, 1
        %s88 = smul.addr %s87, 2
        %s89 = scalar_lea.vmem [#allocation1], %s88
        %s90 = sand.u32 %s11, 1
        %s91 = sand.u32 %s11, 1
        %s92 = smul.addr %s91, 2
        %s93 = scalar_lea.vmem [#allocation1], %s92
        %s94 = sand.u32 %s11, 1
        %s95 = sand.u32 %s11, 1
        %s96 = smul.addr %s95, 2
        %s97 = scalar_lea.vmem [#allocation3], %s96
        %s99 = ssub.s32 4, 1
        %v100 = vld [vmem:[%s93] sm:%s99]
        %101 = vst [vmem:[#allocation0] sm:%s99] %v100
        %s102 = ssub.s32 1, %s16
        %v103 = vld [vmem:[#allocation0] sm:$0xff]
        %104 = vperm.xlu0 %4, %v103
        %v105 = vpop.permute.xlu0 %104
        %106 = vst [vmem:[#allocation2] sm:$0xff] %v105
        %s108 = ssub.s32 4, 1
        %v109 = vld [vmem:[#allocation2] sm:%s108]
        %s111 = ssub.s32 4, 1
        %112 = vst [vmem:[%s97] sm:%s111] %v109
        %s113 = sand.u32 %s11, 1
        %s114 = sand.u32 %s11, 1
        %s115 = smul.addr %s114, 2
        %s116 = scalar_lea.vmem [#allocation3], %s115
        %s117 = smul.addr %s15, 2
        %s118 = sadd.s32 %s16, %s117
        %s119 = smul.addr %s118, 2
        %s120 = scalar_lea.vmem %s1, %s119
        // Predicated region
        $region51: #{reverse.1} parent=49 // pred_check
          _
        $region52: #{reverse.1} parent=49 // pred_check_branch
          %122 = sbr.rel (0) target = $region54
        $region53: #{reverse.1} parent=49 // pred_region
          // Predicated region
          $region55: #{reverse.1} parent=53 // pred_check
            _
          $region56: #{reverse.1} parent=53 // pred_check_branch
            %124 = sbr.rel target = $region58
          $region57: #{reverse.1} parent=53 // pred_region
            // Predicated region
            $region70: #{reverse.1} parent=57 // pred_check
              _
            $region71: #{reverse.1} parent=57 // pred_check_branch
              %140 = sbr.rel (0) target = $region73
            $region72: #{reverse.1} parent=57 // pred_region
              %s142 = ssub.s32 4, 1
              loop: start=0, step=1, limit=1
              $region74: #{reverse.1} parent=72 // loop_pre_header
                _
              $region75: #{reverse.1} parent=72 // loop_header
                %s144 = sphi 0, %s148
                %p145 = scmp.ge.s32.totalorder %s144, 1
                %s149 = sphi %s116, %s116
                %s150 = sphi %s120, %s120
              $region76: #{reverse.1} parent=72 // loop_header_branch
                %147 = sbr.rel (%p145) target = $region80
              $region77: #{reverse.1} parent=72 // loop_body
                %v151 = vld [vmem:[%s149] sm:%s142]
                %152 = vst [vmem:[%s150] sm:%s142] %v151
              $region78: #{reverse.1} parent=72 // loop_footer
                %s148 = sadd.s32 1, %s144
              $region79: #{reverse.1} parent=72 // loop_footer_branch
                %143 = sbr.rel target = $region75
              $region80: #{reverse.1} parent=72 // loop_exit
                _
            $region73: #{reverse.1} parent=57 // pred_fallthru
              _
          $region58: #{reverse.1} parent=53 // pred_fallthru
            _
          // Predicated region
          $region59: #{reverse.1} parent=53 // pred_check
            _
          $region60: #{reverse.1} parent=53 // pred_check_branch
            %126 = sbr.rel (0) target = $region62
          $region61: #{reverse.1} parent=53 // pred_region
            %s128 = ssub.s32 4, 1
            loop: start=0, step=1, limit=1
            $region63: #{reverse.1} parent=61 // loop_pre_header
              _
            $region64: #{reverse.1} parent=61 // loop_header
              %s130 = sphi 0, %s134
              %p131 = scmp.ge.s32.totalorder %s130, 1
              %s135 = sphi %s116, %s116
              %s136 = sphi %s120, %s120
            $region65: #{reverse.1} parent=61 // loop_header_branch
              %133 = sbr.rel (%p131) target = $region69
            $region66: #{reverse.1} parent=61 // loop_body
              %v137 = vld [vmem:[%s135] sm:%s128]
              %138 = vst [vmem:[%s136] sm:%s128] %v137
            $region67: #{reverse.1} parent=61 // loop_footer
              %s134 = sadd.s32 1, %s130
            $region68: #{reverse.1} parent=61 // loop_footer_branch
              %129 = sbr.rel target = $region64
            $region69: #{reverse.1} parent=61 // loop_exit
              _
          $region62: #{reverse.1} parent=53 // pred_fallthru
            _
        $region54: #{reverse.1} parent=49 // pred_fallthru
          _
        %153 = vnop
      $region50: #{reverse.1} parent=5 // pred_fallthru
        _
      %p154 = scmp.le.s32.totalorder 2, %s6
      // Predicated region
      $region81: #{reverse.1} parent=5 // pred_check
        %p155 = pneg %p154
      $region82: #{reverse.1} parent=5 // pred_check_branch
        %157 = sbr.rel (%p155) target = $region84
      $region83: #{reverse.1} parent=5 // pred_region
        %s158 = ssub.s32 %s6, 2
        %s159 = sand.u32 %s12, 1
        %s160 = sand.u32 %s12, 1
        %s161 = smul.addr %s160, 2
        %s162 = scalar_lea.vmem [#allocation3], %s161
      $region84: #{reverse.1} parent=5 // pred_fallthru
        _
    $region6: #{reverse.1} parent=1 // loop_footer
      %s10 = sadd.s32 1, %s6
    $region7: #{reverse.1} parent=1 // loop_footer_branch
      %5 = sbr.rel target = $region3
    $region8: #{reverse.1} parent=1 // loop_exit
      _

// kernel: _forward.2
$region0: #{_forward.2}
  #allocation0 [shape = 'u32[]', space=smem, size = 0x4, offset = 0x4, fixed_abs, tag = 'smem constant byte address 0x4 - core index']
  #allocation1 [shape = 'u32[72,128]{1,0:T(1,128)}', space=vmem, size = 0x9000, scoped, tag = 'internal scratch']
  %s0 = inlined_call_operand.vmem [shape: bf16[128,201], index: 0, kind: input, shape index: {}]
  %s1 = inlined_call_operand.vmem [shape: bf16[2,201,21], index: 1, kind: input, shape index: {}]
  %s2 = inlined_call_operand.vmem [shape: f32[2,1,21], index: 2, kind: output, shape index: {}]
  %s3 = sld [smem:[#allocation0]]
  $region41: #{_forward.2} parent=0
    _
  %s5 = ssub.s32 1, %s3
  %s6 = scalar_select 0, %s5, %s3
  loop: start=0, step=1, limit=4
  $region2: #{_forward.2} parent=0 // loop_pre_header
    _
  $region3: #{_forward.2} parent=0 // loop_header
    %s8 = sphi 0, %s12
    %p9 = scmp.ge.s32.totalorder %s8, 4
    %s15 = sphi 0, %s27
    %s16 = sphi 0, %s23
    %s17 = sphi 0, %s15
    %s18 = sphi 0, %s16
    %s19 = sphi 0, %s17
    %s20 = sphi 0, %s18
    %s28 = sphi 0, %s28
    %s30 = sphi 0, %s28
    %s31 = sphi 0, %s30
    %s45 = sphi 0, %s31
    %s53 = sphi 0, %s55
    %s56 = sphi 0, %s53
    %s57 = sphi 0, %s56
    %s73 = sphi 0, %s57
    %s81 = sphi 0, %s83
    %s84 = sphi 0, %s81
    %s85 = sphi 0, %s84
    %s101 = sphi 0, %s85
  $region4: #{_forward.2} parent=0 // loop_header_branch
    %11 = sbr.rel (%p9) target = $region8
  $region5: #{_forward.2} parent=0 // loop_body
    %s13 = ssub.s32 %s8, 1
    %s14 = ssub.s32 %s8, 2
    %s21 = sadd.s32 1, %s16
    %p22 = scmp.ge.s32.totalorder %s21, 1
    %s23 = scalar_select %p22, 0, %s21
    %s24 = sadd.s32 1, %s15
    %s25 = scalar_select %p22, %s24, %s15
    %p26 = scmp.ge.s32.totalorder %s25, 2
    %s27 = scalar_select %p26, 0, %s25
    %s29 = sadd.s32 %s28, 1
    %p32 = scmp.eq.s32.totalorder %s8, 1
    %p33 = scmp.ne.s32.totalorder %s28, %s30
    %p34 = scmp.eq.s32.totalorder %s8, 0
    %p35 = por %p33, %p34
    %p36 = scmp.ne.s32.totalorder %s28, %s30
    %p37 = scmp.eq.s32.totalorder %s13, 1
    %p38 = por %p36, %p37
    %p39 = scmp.ne.s32.totalorder %s30, %s31
    %p40 = scmp.eq.s32.totalorder %s13, 0
    %p41 = por %p39, %p40
    %p42 = scmp.ne.s32.totalorder %s30, %s31
    %p43 = scmp.eq.s32.totalorder %s14, 1
    %p44 = por %p42, %p43
    %p46 = scmp.ne.s32.totalorder %s31, %s45
    %p47 = scmp.eq.s32.totalorder %s14, 0
    %p48 = por %p46, %p47
    %s49 = ssub.s32 %s15, %s27
    %s50 = ssub.s32 %s16, %s23
    %s51 = sor.u32 %s49, %s50
    %p52 = scmp.eq.s32.totalorder %s51, 0
    %s54 = sadd.s32 %s53, 1
    %s55 = scalar_select %p52, %s53, %s54
    %p58 = pneg %p52
    %p59 = scmp.eq.s32.totalorder %s8, 1
    %p60 = por %p58, %p59
    %p61 = scmp.ne.s32.totalorder %s53, %s56
    %p62 = scmp.eq.s32.totalorder %s8, 0
    %p63 = por %p61, %p62
    %p64 = scmp.ne.s32.totalorder %s53, %s56
    %p65 = scmp.eq.s32.totalorder %s13, 1
    %p66 = por %p64, %p65
    %p67 = scmp.ne.s32.totalorder %s56, %s57
    %p68 = scmp.eq.s32.totalorder %s13, 0
    %p69 = por %p67, %p68
    %p70 = scmp.ne.s32.totalorder %s56, %s57
    %p71 = scmp.eq.s32.totalorder %s14, 1
    %p72 = por %p70, %p71
    %p74 = scmp.ne.s32.totalorder %s57, %s73
    %p75 = scmp.eq.s32.totalorder %s14, 0
    %p76 = por %p74, %p75
    %s77 = ssub.s32 %s15, %s27
    %s78 = ssub.s32 %s16, %s23
    %s79 = sor.u32 %s77, %s78
    %p80 = scmp.eq.s32.totalorder %s79, 0
    %s82 = sadd.s32 %s81, 1
    %s83 = scalar_select %p80, %s81, %s82
    %p86 = pneg %p80
    %p87 = scmp.eq.s32.totalorder %s8, 1
    %p88 = por %p86, %p87
    %p89 = scmp.ne.s32.totalorder %s81, %s84
    %p90 = scmp.eq.s32.totalorder %s8, 0
    %p91 = por %p89, %p90
    %p92 = scmp.ne.s32.totalorder %s81, %s84
    %p93 = scmp.eq.s32.totalorder %s13, 1
    %p94 = por %p92, %p93
    %p95 = scmp.ne.s32.totalorder %s84, %s85
    %p96 = scmp.eq.s32.totalorder %s13, 0
    %p97 = por %p95, %p96
    %p98 = scmp.ne.s32.totalorder %s84, %s85
    %p99 = scmp.eq.s32.totalorder %s14, 1
    %p100 = por %p98, %p99
    %p102 = scmp.ne.s32.totalorder %s85, %s101
    %p103 = scmp.eq.s32.totalorder %s14, 0
    %p104 = por %p102, %p103
    %p105 = scmp.le.s32.totalorder 1, %s8
    %p106 = scmp.lt.s32.totalorder %s8, 3
    %p107 = pnand %p105, %p106
    %p108 = pneg %p107
    // Predicated region
    $region9: #{_forward.2} parent=5 // pred_check
      _
    $region10: #{_forward.2} parent=5 // pred_check_branch
      %110 = sbr.rel (%p107) target = $region12
    $region11: #{_forward.2} parent=5 // pred_region
      %s111 = ssub.s32 %s8, 1
      // Predicated region
      $region13: #{_forward.2} parent=11 // pred_check
        %p112 = pneg %p41
      $region14: #{_forward.2} parent=11 // pred_check_branch
        %114 = sbr.rel (%p112) target = $region16
      $region15: #{_forward.2} parent=11 // pred_region
        _
      $region16: #{_forward.2} parent=11 // pred_fallthru
        _
    $region12: #{_forward.2} parent=5 // pred_fallthru
      _
    %p115 = scmp.lt.s32.totalorder %s8, 2
    // Predicated region
    $region17: #{_forward.2} parent=5 // pred_check
      %p116 = pneg %p115
    $region18: #{_forward.2} parent=5 // pred_check_branch
      %118 = sbr.rel (%p116) target = $region20
    $region19: #{_forward.2} parent=5 // pred_region
      // Predicated region
      $region21: #{_forward.2} parent=19 // pred_check
        %p119 = pneg %p63
      $region22: #{_forward.2} parent=19 // pred_check_branch
        %121 = sbr.rel (%p119) target = $region24
      $region23: #{_forward.2} parent=19 // pred_region
        %p122 = scmp.lt.s32.totalorder %s15, 1
        %s123 = scalar_select %p122, %s15, 1
        %p124 = scmp.lt.s32.totalorder %s16, 0
        %s125 = scalar_select %p124, %s16, 0
        %s126 = smul.addr %s123, 26
        %s127 = sadd.s32 %s125, %s126
        %s128 = smul.addr %s127, 4
        %s129 = scalar_lea.vmem %s1, %s128
      $region24: #{_forward.2} parent=19 // pred_fallthru
        _
    $region20: #{_forward.2} parent=5 // pred_fallthru
      _
    %p130 = scmp.le.s32.totalorder 1, %s8
    %p131 = scmp.lt.s32.totalorder %s8, 3
    %p132 = pnand %p130, %p131
    %p133 = pneg %p132
    // Predicated region
    $region25: #{_forward.2} parent=5 // pred_check
      _
    $region26: #{_forward.2} parent=5 // pred_check_branch
      %135 = sbr.rel (%p132) target = $region28
    $region27: #{_forward.2} parent=5 // pred_region
      %s136 = ssub.s32 %s8, 1
      %p137 = pneg %p41
      %p138 = pneg %p38
      %p139 = scmp.lt.s32.totalorder %s17, 1
      %s140 = scalar_select %p139, %s17, 1
      %p141 = scmp.lt.s32.totalorder %s18, 0
      %s142 = scalar_select %p141, %s18, 0
      %s143 = smul.addr %s140, 26
      %s144 = sadd.s32 %s142, %s143
      %s145 = smul.addr %s144, 4
      %s146 = scalar_lea.vmem %s1, %s145
      %p147 = pneg %p69
      %p148 = pneg %p66
      %p149 = pneg %p97
      %p150 = pneg %p94
      %p151 = scmp.lt.s32.totalorder %s17, 1
      %s152 = scalar_select %p151, %s17, 1
      %p153 = scmp.lt.s32.totalorder %s18, 0
      %s154 = scalar_select %p153, %s18, 0
      %s155 = sadd.s32 %s154, %s152
      %s156 = scalar_lea.vmem %s2, %s155
      %p157 = scmp.lt.s32.totalorder %s17, 1
      %s158 = scalar_select %p157, %s17, 1
      %p159 = scmp.lt.s32.totalorder %s18, 0
      %s160 = scalar_select %p159, %s18, 0
      %s161 = smul.addr %s158, 26
      %s162 = sadd.s32 %s160, %s161
      %s163 = smul.addr %s162, 4
      %s164 = scalar_lea.vmem %s1, %s163
      %p165 = scmp.lt.s32.totalorder %s17, 1
      %s166 = scalar_select %p165, %s17, 1
      %p167 = scmp.lt.s32.totalorder %s18, 0
      %s168 = scalar_select %p167, %s18, 0
      %s169 = sadd.s32 %s168, %s166
      %s170 = scalar_lea.vmem %s2, %s169
      %v172 = vld [vmem:[%s0] sm:$0xff]
      %v173 = vld [vmem:[%s0 + $0x8] sm:$0xff]
      %v174 = vld [vmem:[%s0 + $0x10] sm:$0xff]
      %v175 = vld [vmem:[%s0 + $0x18] sm:$0xff]
      %v176 = vld [vmem:[%s0 + $0x20] sm:$0xff]
      %v177 = vld [vmem:[%s0 + $0x28] sm:$0xff]
      %v178 = vld [vmem:[%s0 + $0x30] sm:$0xff]
      %v179 = vld [vmem:[%s0 + $0x38] sm:$0xff]
      %v180 = vld [vmem:[%s0 + $0x40] sm:$0xff]
      %v181 = vld [vmem:[%s0 + $0x48] sm:$0xff]
      %v182 = vld [vmem:[%s0 + $0x50] sm:$0xff]
      %v183 = vld [vmem:[%s0 + $0x58] sm:$0xff]
      %v184 = vld [vmem:[%s0 + $0x60] sm:$0xff]
      %v185 = vld [vmem:[%s0 + $0x68] sm:$0xff]
      %v186 = vld [vmem:[%s0 + $0x70] sm:$0xff]
      %v187 = vld [vmem:[%s0 + $0x78] sm:$0xff]
      %v188 = vld [vmem:[%s164] sm:$0xf]
      %v189 = vld [vmem:[%s164 + $0x4] sm:$0xf]
      %v190 = vld [vmem:[%s164 + $0x8] sm:$0xf]
      %v191 = vld [vmem:[%s164 + $0xc] sm:$0xf]
      %v192 = vld [vmem:[%s164 + $0x10] sm:$0xf]
      %v193 = vld [vmem:[%s164 + $0x14] sm:$0xf]
      %v194 = vld [vmem:[%s164 + $0x18] sm:$0xf]
      %v195 = vld [vmem:[%s164 + $0x1c] sm:$0xf]
      %v196 = vld [vmem:[%s164 + $0x20] sm:$0xf]
      %v197 = vld [vmem:[%s164 + $0x24] sm:$0xf]
      %v198 = vld [vmem:[%s164 + $0x28] sm:$0xf]
      %v199 = vld [vmem:[%s164 + $0x2c] sm:$0xf]
      %v200 = vld [vmem:[%s164 + $0x30] sm:$0xf]
      %v201 = vld [vmem:[%s164 + $0x34] sm:$0xf]
      %v202 = vld [vmem:[%s164 + $0x38] sm:$0xf]
      %v203 = vld [vmem:[%s164 + $0x3c] sm:$0xf]
      %v204 = vld [vmem:[%s164 + $0x40] sm:$0xf]
      %v205 = vld [vmem:[%s164 + $0x44] sm:$0xf]
      %v206 = vld [vmem:[%s164 + $0x48] sm:$0xf]
      %v207 = vld [vmem:[%s164 + $0x4c] sm:$0xf]
      %v208 = vld [vmem:[%s164 + $0x50] sm:$0xf]
      %v209 = vld [vmem:[%s164 + $0x54] sm:$0xf]
      %v210 = vld [vmem:[%s164 + $0x58] sm:$0xf]
      %v211 = vld [vmem:[%s164 + $0x5c] sm:$0xf]
      %v212 = vld [vmem:[%s164 + $0x60] sm:$0xf]
      %v213 = vld [vmem:[%s164 + $0x64] sm:$0x1]
      %v230 = vunpack.c.l.b16 %v172
      %v231 = vunpack.c.h.b16 %v172
      %v232 = vunpack.c.l.b16 %v173
      %v233 = vunpack.c.h.b16 %v173
      %v234 = vunpack.c.l.b16 %v174
      %v235 = vunpack.c.h.b16 %v174
      %v236 = vunpack.c.l.b16 %v175
      %v237 = vunpack.c.h.b16 %v175
      %v238 = vunpack.c.l.b16 %v176
      %v239 = vunpack.c.h.b16 %v176
      %v240 = vunpack.c.l.b16 %v177
      %v241 = vunpack.c.h.b16 %v177
      %v242 = vunpack.c.l.b16 %v178
      %v243 = vunpack.c.h.b16 %v178
      %v244 = vunpack.c.l.b16 %v179
      %v245 = vunpack.c.h.b16 %v179
      %v246 = vunpack.c.l.b16 %v180
      %v247 = vunpack.c.h.b16 %v180
      %v248 = vunpack.c.l.b16 %v181
      %v249 = vunpack.c.h.b16 %v181
      %v250 = vunpack.c.l.b16 %v182
      %v251 = vunpack.c.h.b16 %v182
      %v252 = vunpack.c.l.b16 %v183
      %v253 = vunpack.c.h.b16 %v183
      %v254 = vunpack.c.l.b16 %v184
      %v255 = vunpack.c.h.b16 %v184
      %v256 = vunpack.c.l.b16 %v185
      %v257 = vunpack.c.h.b16 %v185
      %v258 = vunpack.c.l.b16 %v186
      %v259 = vunpack.c.h.b16 %v186
      %v260 = vunpack.c.l.b16 %v187
      %v261 = vunpack.c.h.b16 %v187
      %v262 = vpack.c.b16 %v232, %v230
      %v263 = vpack.c.b16 %v233, %v231
      %v264 = vpack.c.b16 %v236, %v234
      %v265 = vpack.c.b16 %v237, %v235
      %v266 = vpack.c.b16 %v240, %v238
      %v267 = vpack.c.b16 %v241, %v239
      %v268 = vpack.c.b16 %v244, %v242
      %v269 = vpack.c.b16 %v245, %v243
      %v270 = vpack.c.b16 %v248, %v246
      %v271 = vpack.c.b16 %v249, %v247
      %v272 = vpack.c.b16 %v252, %v250
      %v273 = vpack.c.b16 %v253, %v251
      %v274 = vpack.c.b16 %v256, %v254
      %v275 = vpack.c.b16 %v257, %v255
      %v276 = vpack.c.b16 %v260, %v258
      %v277 = vpack.c.b16 %v261, %v259
      %v312 = vunpack.c.l.b16 %v188
      %v313 = vunpack.c.l.b16 %v189
      %v314 = vunpack.c.l.b16 %v190
      %v315 = vunpack.c.l.b16 %v191
      %v316 = vunpack.c.l.b16 %v192
      %v317 = vunpack.c.l.b16 %v193
      %v318 = vunpack.c.l.b16 %v194
      %v319 = vunpack.c.l.b16 %v195
      %v320 = vunpack.c.l.b16 %v196
      %v321 = vunpack.c.l.b16 %v197
      %v322 = vunpack.c.l.b16 %v198
      %v323 = vunpack.c.l.b16 %v199
      %v324 = vunpack.c.l.b16 %v200
      %v325 = vunpack.c.l.b16 %v201
      %v326 = vunpack.c.l.b16 %v202
      %v327 = vunpack.c.l.b16 %v203
      %v328 = vunpack.c.l.b16 %v204
      %v329 = vunpack.c.l.b16 %v205
      %v330 = vunpack.c.l.b16 %v206
      %v331 = vunpack.c.l.b16 %v207
      %v332 = vunpack.c.l.b16 %v208
      %v333 = vunpack.c.l.b16 %v209
      %v334 = vunpack.c.l.b16 %v210
      %v335 = vunpack.c.l.b16 %v211
      %v336 = vunpack.c.l.b16 %v212
      %v337 = vunpack.c.l.b16 %v213
      %v338 = vpack.c.b16 %v313, %v312
      %v339 = vpack.c.b16 %v315, %v314
      %v340 = vpack.c.b16 %v317, %v316
      %v341 = vpack.c.b16 %v319, %v318
      %v342 = vpack.c.b16 %v321, %v320
      %v343 = vpack.c.b16 %v323, %v322
      %v344 = vpack.c.b16 %v325, %v324
      %v345 = vpack.c.b16 %v327, %v326
      %v346 = vpack.c.b16 %v329, %v328
      %v347 = vpack.c.b16 %v331, %v330
      %v348 = vpack.c.b16 %v333, %v332
      %v349 = vpack.c.b16 %v335, %v334
      %v350 = vpack.c.b16 %v337, %v336
      %vm363 = vcmask 596992
      %v365 = vsel %vm363, %v263, 0
      %v368 = vsel %vm363, %v265, 0
      %v371 = vsel %vm363, %v267, 0
      %v374 = vsel %vm363, %v269, 0
      %v377 = vsel %vm363, %v271, 0
      %v380 = vsel %vm363, %v273, 0
      %v383 = vsel %vm363, %v275, 0
      %v386 = vsel %vm363, %v277, 0
      %vm388 = vcmask 1043456
      %vm389 = vcmask 1044480
      %v390 = vsel %vm388, 4294967295, 65535
      %v391 = vsel %vm389, %v390, 0
      %v393 = vand.u32 %v350, %v391
      %395 = vmatpush.bf16.msra.mxu0 %v345
      %396 = vmatpush.bf16.msra.mxu0 %v344
      %397 = vmatpush.bf16.msra.mxu0 %v343
      %398 = vmatpush.bf16.msra.mxu0 %v342
      %399 = vmatpush.bf16.msra.mxu0 %v341
      %400 = vmatpush.bf16.msra.mxu0 %v340
      %401 = vmatpush.bf16.msra.mxu0 %v339
      %402 = vmatpush.bf16.msra.mxu0 %v338
      %403 = vmatmul.bf16.gmra.mxu0 %v262
      %v404 = vpop.f32.mrf.mxu0
      %v405 = vadd.f32 0.0, %v404
      %v406 = vpop.f32.mrf.mxu0
      %v407 = vadd.f32 0.0, %v406
      %408 = vmatmul.bf16.gmra.mxu0 %v264
      %v409 = vpop.f32.mrf.mxu0
      %v410 = vadd.f32 0.0, %v409
      %v411 = vpop.f32.mrf.mxu0
      %v412 = vadd.f32 0.0, %v411
      %413 = vmatmul.bf16.gmra.mxu0 %v266
      %v414 = vpop.f32.mrf.mxu0
      %v415 = vadd.f32 0.0, %v414
      %v416 = vpop.f32.mrf.mxu0
      %v417 = vadd.f32 0.0, %v416
      %418 = vmatmul.bf16.gmra.mxu0 %v268
      %v419 = vpop.f32.mrf.mxu0
      %v420 = vadd.f32 0.0, %v419
      %v421 = vpop.f32.mrf.mxu0
      %v422 = vadd.f32 0.0, %v421
      %423 = vmatmul.bf16.gmra.mxu0 %v270
      %v424 = vpop.f32.mrf.mxu0
      %v425 = vadd.f32 0.0, %v424
      %v426 = vpop.f32.mrf.mxu0
      %v427 = vadd.f32 0.0, %v426
      %428 = vmatmul.bf16.gmra.mxu0 %v272
      %v429 = vpop.f32.mrf.mxu0
      %v430 = vadd.f32 0.0, %v429
      %v431 = vpop.f32.mrf.mxu0
      %v432 = vadd.f32 0.0, %v431
      %433 = vmatmul.bf16.gmra.mxu0 %v274
      %v434 = vpop.f32.mrf.mxu0
      %v435 = vadd.f32 0.0, %v434
      %v436 = vpop.f32.mrf.mxu0
      %v437 = vadd.f32 0.0, %v436
      %438 = vmatmul.bf16.gmra.mxu0 %v276
      %v439 = vpop.f32.mrf.mxu0
      %v440 = vadd.f32 0.0, %v439
      %v441 = vpop.f32.mrf.mxu0
      %v442 = vadd.f32 0.0, %v441
      %443 = vdwg.mxu0
      %444 = vmatpush.bf16.msra.mxu0 0
      %445 = vmatpush.bf16.msra.mxu0 0
      %446 = vmatpush.bf16.msra.mxu0 0
      %447 = vmatpush.bf16.msra.mxu0 %v393
      %448 = vmatpush.bf16.msra.mxu0 %v349
      %449 = vmatpush.bf16.msra.mxu0 %v348
      %450 = vmatpush.bf16.msra.mxu0 %v347
      %451 = vmatpush.bf16.msra.mxu0 %v346
      %452 = vmatmul.bf16.gmra.mxu0 %v365
      %v453 = vpop.f32.mrf.mxu0
      %v454 = vadd.f32 %v405, %v453
      %v455 = vpop.f32.mrf.mxu0
      %v456 = vadd.f32 %v407, %v455
      %457 = vmatmul.bf16.gmra.mxu0 %v368
      %v458 = vpop.f32.mrf.mxu0
      %v459 = vadd.f32 %v410, %v458
      %v460 = vpop.f32.mrf.mxu0
      %v461 = vadd.f32 %v412, %v460
      %462 = vmatmul.bf16.gmra.mxu0 %v371
      %v463 = vpop.f32.mrf.mxu0
      %v464 = vadd.f32 %v415, %v463
      %v465 = vpop.f32.mrf.mxu0
      %v466 = vadd.f32 %v417, %v465
      %467 = vmatmul.bf16.gmra.mxu0 %v374
      %v468 = vpop.f32.mrf.mxu0
      %v469 = vadd.f32 %v420, %v468
      %v470 = vpop.f32.mrf.mxu0
      %v471 = vadd.f32 %v422, %v470
      %472 = vmatmul.bf16.gmra.mxu0 %v377
      %v473 = vpop.f32.mrf.mxu0
      %v474 = vadd.f32 %v425, %v473
      %v475 = vpop.f32.mrf.mxu0
      %v476 = vadd.f32 %v427, %v475
      %477 = vmatmul.bf16.gmra.mxu0 %v380
      %v478 = vpop.f32.mrf.mxu0
      %v479 = vadd.f32 %v430, %v478
      %v480 = vpop.f32.mrf.mxu0
      %v481 = vadd.f32 %v432, %v480
      %482 = vmatmul.bf16.gmra.mxu0 %v383
      %v483 = vpop.f32.mrf.mxu0
      %v484 = vadd.f32 %v435, %v483
      %v485 = vpop.f32.mrf.mxu0
      %v486 = vadd.f32 %v437, %v485
      %487 = vmatmul.bf16.gmra.mxu0 %v386
      %v488 = vpop.f32.mrf.mxu0
      %v489 = vadd.f32 %v440, %v488
      %v490 = vpop.f32.mrf.mxu0
      %v491 = vadd.f32 %v442, %v490
      %492 = vdwg.mxu0
      %v493 = vlaneseq
      %v494 = vand.u32 %v493, 127
      %s495 = smul.u32 %s18, 21
      %v496 = vstv %s495
      %v497 = vadd.s32 %v494, %v496
      %vm498 = vcmp.lt.s32.totalorder %v497, 21
      %v499 = vsel %vm498, 1, 0
      %vm500 = vcmp.eq.s32.totalorder %v499, 1
      %v501 = vsel %vm500, %v454, -inf
      %v502 = vsel %vm500, %v456, -inf
      %v503 = vsel %vm500, %v459, -inf
      %v504 = vsel %vm500, %v461, -inf
      %v505 = vsel %vm500, %v464, -inf
      %v506 = vsel %vm500, %v466, -inf
      %v507 = vsel %vm500, %v469, -inf
      %v508 = vsel %vm500, %v471, -inf
      %v509 = vsel %vm500, %v474, -inf
      %v510 = vsel %vm500, %v476, -inf
      %v511 = vsel %vm500, %v479, -inf
      %v512 = vsel %vm500, %v481, -inf
      %v513 = vsel %vm500, %v484, -inf
      %v514 = vsel %vm500, %v486, -inf
      %v515 = vsel %vm500, %v489, -inf
      %v516 = vsel %vm500, %v491, -inf
      %vm517 = vcmask 171008
      %v518 = vsel %vm517, %v501, -inf
      %v519 = vsel %vm517, %v502, -inf
      %v520 = vsel %vm517, %v503, -inf
      %v521 = vsel %vm517, %v504, -inf
      %v522 = vsel %vm517, %v505, -inf
      %v523 = vmax.f32 %v518, %v522
      %v524 = vsel %vm517, %v506, -inf
      %v525 = vmax.f32 %v519, %v524
      %v526 = vsel %vm517, %v507, -inf
      %v527 = vmax.f32 %v520, %v526
      %v528 = vsel %vm517, %v508, -inf
      %v529 = vmax.f32 %v521, %v528
      %v530 = vsel %vm517, %v509, -inf
      %v531 = vmax.f32 %v523, %v530
      %v532 = vsel %vm517, %v510, -inf
      %v533 = vmax.f32 %v525, %v532
      %v534 = vsel %vm517, %v511, -inf
      %v535 = vmax.f32 %v527, %v534
      %v536 = vsel %vm517, %v512, -inf
      %v537 = vmax.f32 %v529, %v536
      %v538 = vsel %vm517, %v513, -inf
      %v539 = vmax.f32 %v531, %v538
      %v540 = vsel %vm517, %v514, -inf
      %v541 = vmax.f32 %v533, %v540
      %v542 = vsel %vm517, %v515, -inf
      %v543 = vmax.f32 %v535, %v542
      %v544 = vsel %vm517, %v516, -inf
      %v545 = vmax.f32 %v537, %v544
      %v546 = vmax.f32 %v539, %v541
      %v547 = vmax.f32 %v543, %v545
      %v548 = vmax.f32 %v546, %v547
      %v549 = vrot.slane %v548, 4
      %v550 = vmax.f32 %v548, %v549
      %v551 = vrot.slane %v550, 2
      %v552 = vmax.f32 %v550, %v551
      %v553 = vrot.slane %v552, 1
      %v554 = vmax.f32 %v552, %v553
      %vm555 = vcmask 163840
      %556 = vst.msk [vmem:[%s170] sm:$0x1] %vm555, %v554
      %p557 = scmp.lt.s32.totalorder %s17, 1
      %s558 = scalar_select %p557, %s17, 1
      %p559 = scmp.lt.s32.totalorder %s18, 0
      %s560 = scalar_select %p559, %s18, 0
      %s561 = sadd.s32 %s560, %s558
      %s562 = scalar_lea.vmem %s2, %s561
      // Predicated region
      $region29: #{_forward.2} parent=27 // pred_check
        %p563 = pneg %p94
      $region30: #{_forward.2} parent=27 // pred_check_branch
        %565 = sbr.rel (%p563) target = $region32
      $region31: #{_forward.2} parent=27 // pred_region
        _
      $region32: #{_forward.2} parent=27 // pred_fallthru
        _
    $region28: #{_forward.2} parent=5 // pred_fallthru
      _
    %p566 = scmp.le.s32.totalorder 2, %s8
    // Predicated region
    $region33: #{_forward.2} parent=5 // pred_check
      %p567 = pneg %p566
    $region34: #{_forward.2} parent=5 // pred_check_branch
      %569 = sbr.rel (%p567) target = $region36
    $region35: #{_forward.2} parent=5 // pred_region
      %s570 = ssub.s32 %s8, 2
      // Predicated region
      $region37: #{_forward.2} parent=35 // pred_check
        %p571 = pneg %p100
      $region38: #{_forward.2} parent=35 // pred_check_branch
        %573 = sbr.rel (%p571) target = $region40
      $region39: #{_forward.2} parent=35 // pred_region
        %p574 = scmp.lt.s32.totalorder %s19, 1
        %s575 = scalar_select %p574, %s19, 1
        %p576 = scmp.lt.s32.totalorder %s20, 0
        %s577 = scalar_select %p576, %s20, 0
        %s578 = sadd.s32 %s577, %s575
        %s579 = scalar_lea.vmem %s2, %s578
      $region40: #{_forward.2} parent=35 // pred_fallthru
        _
    $region36: #{_forward.2} parent=5 // pred_fallthru
      _
  $region6: #{_forward.2} parent=0 // loop_footer
    %s12 = sadd.s32 1, %s8
  $region7: #{_forward.2} parent=0 // loop_footer_branch
    %7 = sbr.rel target = $region3
  $region8: #{_forward.2} parent=0 // loop_exit
    _

// kernel: _forward.3
$region0: #{_forward.3}
  #allocation0 [shape = 'u32[]', space=smem, size = 0x4, offset = 0x4, fixed_abs, tag = 'smem constant byte address 0x4 - core index']
  #allocation1 [shape = 'u32[72,128]{1,0:T(1,128)}', space=vmem, size = 0x9000, scoped, tag = 'internal scratch']
  #allocation2 [shape = 'f32[1]{0:T(128)S(6)}', space=smem, size = 0x200, scoped, tag = 'scoped memory for _forward.3']
  %s0 = inlined_call_operand.vmem [shape: bf16[128,201], index: 0, kind: input, shape index: {}]
  %s1 = inlined_call_operand.vmem [shape: f32[40,128], index: 1, kind: input, shape index: {}]
  %s2 = inlined_call_operand.vmem [shape: bf16[2,201,21], index: 2, kind: input, shape index: {}]
  %s3 = inlined_call_operand.<no memory space> [shape: f32[1], index: 3, kind: input, shape index: {}]
  %s4 = inlined_call_operand.vmem [shape: f32[2,40,21], index: 4, kind: output, shape index: {}]
  %s5 = sld [smem:[#allocation0]]
  $region49: #{_forward.3} parent=0
    _
  %s7 = ssub.s32 1, %s5
  %s8 = scalar_select 0, %s7, %s5
  %9 = sst [smem:[#allocation2]] %s3
  loop: start=0, step=1, limit=4
  $region2: #{_forward.3} parent=0 // loop_pre_header
    _
  $region3: #{_forward.3} parent=0 // loop_header
    %s11 = sphi 0, %s15
    %p12 = scmp.ge.s32.totalorder %s11, 4
    %s18 = sphi 0, %s30
    %s19 = sphi 0, %s26
    %s20 = sphi 0, %s18
    %s21 = sphi 0, %s19
    %s22 = sphi 0, %s20
    %s23 = sphi 0, %s21
    %s31 = sphi 0, %s31
    %s33 = sphi 0, %s31
    %s34 = sphi 0, %s33
    %s48 = sphi 0, %s34
    %s52 = sphi 0, %s52
    %s54 = sphi 0, %s52
    %s55 = sphi 0, %s54
    %s69 = sphi 0, %s55
    %s77 = sphi 0, %s79
    %s80 = sphi 0, %s77
    %s81 = sphi 0, %s80
    %s97 = sphi 0, %s81
    %s101 = sphi 0, %s101
    %s103 = sphi 0, %s101
    %s104 = sphi 0, %s103
    %s118 = sphi 0, %s104
    %s126 = sphi 0, %s128
    %s129 = sphi 0, %s126
    %s130 = sphi 0, %s129
    %s146 = sphi 0, %s130
  $region4: #{_forward.3} parent=0 // loop_header_branch
    %14 = sbr.rel (%p12) target = $region8
  $region5: #{_forward.3} parent=0 // loop_body
    %s16 = ssub.s32 %s11, 1
    %s17 = ssub.s32 %s11, 2
    %s24 = sadd.s32 1, %s19
    %p25 = scmp.ge.s32.totalorder %s24, 1
    %s26 = scalar_select %p25, 0, %s24
    %s27 = sadd.s32 1, %s18
    %s28 = scalar_select %p25, %s27, %s18
    %p29 = scmp.ge.s32.totalorder %s28, 2
    %s30 = scalar_select %p29, 0, %s28
    %s32 = sadd.s32 %s31, 1
    %p35 = scmp.eq.s32.totalorder %s11, 1
    %p36 = scmp.ne.s32.totalorder %s31, %s33
    %p37 = scmp.eq.s32.totalorder %s11, 0
    %p38 = por %p36, %p37
    %p39 = scmp.ne.s32.totalorder %s31, %s33
    %p40 = scmp.eq.s32.totalorder %s16, 1
    %p41 = por %p39, %p40
    %p42 = scmp.ne.s32.totalorder %s33, %s34
    %p43 = scmp.eq.s32.totalorder %s16, 0
    %p44 = por %p42, %p43
    %p45 = scmp.ne.s32.totalorder %s33, %s34
    %p46 = scmp.eq.s32.totalorder %s17, 1
    %p47 = por %p45, %p46
    %p49 = scmp.ne.s32.totalorder %s34, %s48
    %p50 = scmp.eq.s32.totalorder %s17, 0
    %p51 = por %p49, %p50
    %s53 = sadd.s32 %s52, 1
    %p56 = scmp.eq.s32.totalorder %s11, 1
    %p57 = scmp.ne.s32.totalorder %s52, %s54
    %p58 = scmp.eq.s32.totalorder %s11, 0
    %p59 = por %p57, %p58
    %p60 = scmp.ne.s32.totalorder %s52, %s54
    %p61 = scmp.eq.s32.totalorder %s16, 1
    %p62 = por %p60, %p61
    %p63 = scmp.ne.s32.totalorder %s54, %s55
    %p64 = scmp.eq.s32.totalorder %s16, 0
    %p65 = por %p63, %p64
    %p66 = scmp.ne.s32.totalorder %s54, %s55
    %p67 = scmp.eq.s32.totalorder %s17, 1
    %p68 = por %p66, %p67
    %p70 = scmp.ne.s32.totalorder %s55, %s69
    %p71 = scmp.eq.s32.totalorder %s17, 0
    %p72 = por %p70, %p71
    %s73 = ssub.s32 %s18, %s30
    %s74 = ssub.s32 %s19, %s26
    %s75 = sor.u32 %s73, %s74
    %p76 = scmp.eq.s32.totalorder %s75, 0
    %s78 = sadd.s32 %s77, 1
    %s79 = scalar_select %p76, %s77, %s78
    %p82 = pneg %p76
    %p83 = scmp.eq.s32.totalorder %s11, 1
    %p84 = por %p82, %p83
    %p85 = scmp.ne.s32.totalorder %s77, %s80
    %p86 = scmp.eq.s32.totalorder %s11, 0
    %p87 = por %p85, %p86
    %p88 = scmp.ne.s32.totalorder %s77, %s80
    %p89 = scmp.eq.s32.totalorder %s16, 1
    %p90 = por %p88, %p89
    %p91 = scmp.ne.s32.totalorder %s80, %s81
    %p92 = scmp.eq.s32.totalorder %s16, 0
    %p93 = por %p91, %p92
    %p94 = scmp.ne.s32.totalorder %s80, %s81
    %p95 = scmp.eq.s32.totalorder %s17, 1
    %p96 = por %p94, %p95
    %p98 = scmp.ne.s32.totalorder %s81, %s97
    %p99 = scmp.eq.s32.totalorder %s17, 0
    %p100 = por %p98, %p99
    %s102 = sadd.s32 %s101, 1
    %p105 = scmp.eq.s32.totalorder %s11, 1
    %p106 = scmp.ne.s32.totalorder %s101, %s103
    %p107 = scmp.eq.s32.totalorder %s11, 0
    %p108 = por %p106, %p107
    %p109 = scmp.ne.s32.totalorder %s101, %s103
    %p110 = scmp.eq.s32.totalorder %s16, 1
    %p111 = por %p109, %p110
    %p112 = scmp.ne.s32.totalorder %s103, %s104
    %p113 = scmp.eq.s32.totalorder %s16, 0
    %p114 = por %p112, %p113
    %p115 = scmp.ne.s32.totalorder %s103, %s104
    %p116 = scmp.eq.s32.totalorder %s17, 1
    %p117 = por %p115, %p116
    %p119 = scmp.ne.s32.totalorder %s104, %s118
    %p120 = scmp.eq.s32.totalorder %s17, 0
    %p121 = por %p119, %p120
    %s122 = ssub.s32 %s18, %s30
    %s123 = ssub.s32 %s19, %s26
    %s124 = sor.u32 %s122, %s123
    %p125 = scmp.eq.s32.totalorder %s124, 0
    %s127 = sadd.s32 %s126, 1
    %s128 = scalar_select %p125, %s126, %s127
    %p131 = pneg %p125
    %p132 = scmp.eq.s32.totalorder %s11, 1
    %p133 = por %p131, %p132
    %p134 = scmp.ne.s32.totalorder %s126, %s129
    %p135 = scmp.eq.s32.totalorder %s11, 0
    %p136 = por %p134, %p135
    %p137 = scmp.ne.s32.totalorder %s126, %s129
    %p138 = scmp.eq.s32.totalorder %s16, 1
    %p139 = por %p137, %p138
    %p140 = scmp.ne.s32.totalorder %s129, %s130
    %p141 = scmp.eq.s32.totalorder %s16, 0
    %p142 = por %p140, %p141
    %p143 = scmp.ne.s32.totalorder %s129, %s130
    %p144 = scmp.eq.s32.totalorder %s17, 1
    %p145 = por %p143, %p144
    %p147 = scmp.ne.s32.totalorder %s130, %s146
    %p148 = scmp.eq.s32.totalorder %s17, 0
    %p149 = por %p147, %p148
    %p150 = scmp.le.s32.totalorder 1, %s11
    %p151 = scmp.lt.s32.totalorder %s11, 3
    %p152 = pnand %p150, %p151
    %p153 = pneg %p152
    // Predicated region
    $region9: #{_forward.3} parent=5 // pred_check
      _
    $region10: #{_forward.3} parent=5 // pred_check_branch
      %155 = sbr.rel (%p152) target = $region12
    $region11: #{_forward.3} parent=5 // pred_region
      %s156 = ssub.s32 %s11, 1
      // Predicated region
      $region13: #{_forward.3} parent=11 // pred_check
        %p157 = pneg %p44
      $region14: #{_forward.3} parent=11 // pred_check_branch
        %159 = sbr.rel (%p157) target = $region16
      $region15: #{_forward.3} parent=11 // pred_region
        _
      $region16: #{_forward.3} parent=11 // pred_fallthru
        _
      // Predicated region
      $region17: #{_forward.3} parent=11 // pred_check
        %p160 = pneg %p65
      $region18: #{_forward.3} parent=11 // pred_check_branch
        %162 = sbr.rel (%p160) target = $region20
      $region19: #{_forward.3} parent=11 // pred_region
        _
      $region20: #{_forward.3} parent=11 // pred_fallthru
        _
      // Predicated region
      $region21: #{_forward.3} parent=11 // pred_check
        %p163 = pneg %p114
      $region22: #{_forward.3} parent=11 // pred_check_branch
        %165 = sbr.rel (%p163) target = $region24
      $region23: #{_forward.3} parent=11 // pred_region
        _
      $region24: #{_forward.3} parent=11 // pred_fallthru
        _
    $region12: #{_forward.3} parent=5 // pred_fallthru
      _
    %p166 = scmp.lt.s32.totalorder %s11, 2
    // Predicated region
    $region25: #{_forward.3} parent=5 // pred_check
      %p167 = pneg %p166
    $region26: #{_forward.3} parent=5 // pred_check_branch
      %169 = sbr.rel (%p167) target = $region28
    $region27: #{_forward.3} parent=5 // pred_region
      // Predicated region
      $region29: #{_forward.3} parent=27 // pred_check
        %p170 = pneg %p87
      $region30: #{_forward.3} parent=27 // pred_check_branch
        %172 = sbr.rel (%p170) target = $region32
      $region31: #{_forward.3} parent=27 // pred_region
        %p173 = scmp.lt.s32.totalorder %s18, 1
        %s174 = scalar_select %p173, %s18, 1
        %p175 = scmp.lt.s32.totalorder %s19, 0
        %s176 = scalar_select %p175, %s19, 0
        %s177 = smul.addr %s174, 26
        %s178 = sadd.s32 %s176, %s177
        %s179 = smul.addr %s178, 4
        %s180 = scalar_lea.vmem %s2, %s179
      $region32: #{_forward.3} parent=27 // pred_fallthru
        _
    $region28: #{_forward.3} parent=5 // pred_fallthru
      _
    %p181 = scmp.le.s32.totalorder 1, %s11
    %p182 = scmp.lt.s32.totalorder %s11, 3
    %p183 = pnand %p181, %p182
    %p184 = pneg %p183
    // Predicated region
    $region33: #{_forward.3} parent=5 // pred_check
      _
    $region34: #{_forward.3} parent=5 // pred_check_branch
      %186 = sbr.rel (%p183) target = $region36
    $region35: #{_forward.3} parent=5 // pred_region
      %s187 = ssub.s32 %s11, 1
      %p188 = pneg %p44
      %p189 = pneg %p41
      %p190 = pneg %p65
      %p191 = pneg %p62
      %p192 = scmp.lt.s32.totalorder %s20, 1
      %s193 = scalar_select %p192, %s20, 1
      %p194 = scmp.lt.s32.totalorder %s21, 0
      %s195 = scalar_select %p194, %s21, 0
      %s196 = smul.addr %s193, 26
      %s197 = sadd.s32 %s195, %s196
      %s198 = smul.addr %s197, 4
      %s199 = scalar_lea.vmem %s2, %s198
      %p200 = pneg %p93
      %p201 = pneg %p90
      %p202 = pneg %p114
      %p203 = pneg %p111
      %p204 = pneg %p142
      %p205 = pneg %p139
      %p206 = scmp.lt.s32.totalorder %s20, 1
      %s207 = scalar_select %p206, %s20, 1
      %p208 = scmp.lt.s32.totalorder %s21, 0
      %s209 = scalar_select %p208, %s21, 0
      %s210 = smul.addr %s207, 5
      %s211 = sadd.s32 %s209, %s210
      %s212 = smul.addr %s211, 8
      %s213 = scalar_lea.vmem %s4, %s212
      %p214 = scmp.lt.s32.totalorder %s20, 1
      %s215 = scalar_select %p214, %s20, 1
      %p216 = scmp.lt.s32.totalorder %s21, 0
      %s217 = scalar_select %p216, %s21, 0
      %s218 = smul.addr %s215, 26
      %s219 = sadd.s32 %s217, %s218
      %s220 = smul.addr %s219, 4
      %s221 = scalar_lea.vmem %s2, %s220
      %p222 = scmp.lt.s32.totalorder %s20, 1
      %s223 = scalar_select %p222, %s20, 1
      %p224 = scmp.lt.s32.totalorder %s21, 0
      %s225 = scalar_select %p224, %s21, 0
      %s226 = smul.addr %s223, 5
      %s227 = sadd.s32 %s225, %s226
      %s228 = smul.addr %s227, 8
      %s229 = scalar_lea.vmem %s4, %s228
      %v231 = vld [vmem:[%s0] sm:$0xff]
      %v232 = vld [vmem:[%s0 + $0x8] sm:$0xff]
      %v233 = vld [vmem:[%s0 + $0x10] sm:$0xff]
      %v234 = vld [vmem:[%s0 + $0x18] sm:$0xff]
      %v235 = vld [vmem:[%s0 + $0x20] sm:$0xff]
      %v236 = vld [vmem:[%s0 + $0x28] sm:$0xff]
      %v237 = vld [vmem:[%s0 + $0x30] sm:$0xff]
      %v238 = vld [vmem:[%s0 + $0x38] sm:$0xff]
      %v239 = vld [vmem:[%s0 + $0x40] sm:$0xff]
      %v240 = vld [vmem:[%s0 + $0x48] sm:$0xff]
      %v241 = vld [vmem:[%s0 + $0x50] sm:$0xff]
      %v242 = vld [vmem:[%s0 + $0x58] sm:$0xff]
      %v243 = vld [vmem:[%s0 + $0x60] sm:$0xff]
      %v244 = vld [vmem:[%s0 + $0x68] sm:$0xff]
      %v245 = vld [vmem:[%s0 + $0x70] sm:$0xff]
      %v246 = vld [vmem:[%s0 + $0x78] sm:$0xff]
      %v247 = vld [vmem:[%s221] sm:$0xf]
      %v248 = vld [vmem:[%s221 + $0x4] sm:$0xf]
      %v249 = vld [vmem:[%s221 + $0x8] sm:$0xf]
      %v250 = vld [vmem:[%s221 + $0xc] sm:$0xf]
      %v251 = vld [vmem:[%s221 + $0x10] sm:$0xf]
      %v252 = vld [vmem:[%s221 + $0x14] sm:$0xf]
      %v253 = vld [vmem:[%s221 + $0x18] sm:$0xf]
      %v254 = vld [vmem:[%s221 + $0x1c] sm:$0xf]
      %v255 = vld [vmem:[%s221 + $0x20] sm:$0xf]
      %v256 = vld [vmem:[%s221 + $0x24] sm:$0xf]
      %v257 = vld [vmem:[%s221 + $0x28] sm:$0xf]
      %v258 = vld [vmem:[%s221 + $0x2c] sm:$0xf]
      %v259 = vld [vmem:[%s221 + $0x30] sm:$0xf]
      %v260 = vld [vmem:[%s221 + $0x34] sm:$0xf]
      %v261 = vld [vmem:[%s221 + $0x38] sm:$0xf]
      %v262 = vld [vmem:[%s221 + $0x3c] sm:$0xf]
      %v263 = vld [vmem:[%s221 + $0x40] sm:$0xf]
      %v264 = vld [vmem:[%s221 + $0x44] sm:$0xf]
      %v265 = vld [vmem:[%s221 + $0x48] sm:$0xf]
      %v266 = vld [vmem:[%s221 + $0x4c] sm:$0xf]
      %v267 = vld [vmem:[%s221 + $0x50] sm:$0xf]
      %v268 = vld [vmem:[%s221 + $0x54] sm:$0xf]
      %v269 = vld [vmem:[%s221 + $0x58] sm:$0xf]
      %v270 = vld [vmem:[%s221 + $0x5c] sm:$0xf]
      %v271 = vld [vmem:[%s221 + $0x60] sm:$0xf]
      %v272 = vld [vmem:[%s221 + $0x64] sm:$0x1]
      %v289 = vunpack.c.l.b16 %v231
      %v290 = vunpack.c.h.b16 %v231
      %v291 = vunpack.c.l.b16 %v232
      %v292 = vunpack.c.h.b16 %v232
      %v293 = vunpack.c.l.b16 %v233
      %v294 = vunpack.c.h.b16 %v233
      %v295 = vunpack.c.l.b16 %v234
      %v296 = vunpack.c.h.b16 %v234
      %v297 = vunpack.c.l.b16 %v235
      %v298 = vunpack.c.h.b16 %v235
      %v299 = vunpack.c.l.b16 %v236
      %v300 = vunpack.c.h.b16 %v236
      %v301 = vunpack.c.l.b16 %v237
      %v302 = vunpack.c.h.b16 %v237
      %v303 = vunpack.c.l.b16 %v238
      %v304 = vunpack.c.h.b16 %v238
      %v305 = vunpack.c.l.b16 %v239
      %v306 = vunpack.c.h.b16 %v239
      %v307 = vunpack.c.l.b16 %v240
      %v308 = vunpack.c.h.b16 %v240
      %v309 = vunpack.c.l.b16 %v241
      %v310 = vunpack.c.h.b16 %v241
      %v311 = vunpack.c.l.b16 %v242
      %v312 = vunpack.c.h.b16 %v242
      %v313 = vunpack.c.l.b16 %v243
      %v314 = vunpack.c.h.b16 %v243
      %v315 = vunpack.c.l.b16 %v244
      %v316 = vunpack.c.h.b16 %v244
      %v317 = vunpack.c.l.b16 %v245
      %v318 = vunpack.c.h.b16 %v245
      %v319 = vunpack.c.l.b16 %v246
      %v320 = vunpack.c.h.b16 %v246
      %v321 = vpack.c.b16 %v291, %v289
      %v322 = vpack.c.b16 %v292, %v290
      %v323 = vpack.c.b16 %v295, %v293
      %v324 = vpack.c.b16 %v296, %v294
      %v325 = vpack.c.b16 %v299, %v297
      %v326 = vpack.c.b16 %v300, %v298
      %v327 = vpack.c.b16 %v303, %v301
      %v328 = vpack.c.b16 %v304, %v302
      %v329 = vpack.c.b16 %v307, %v305
      %v330 = vpack.c.b16 %v308, %v306
      %v331 = vpack.c.b16 %v311, %v309
      %v332 = vpack.c.b16 %v312, %v310
      %v333 = vpack.c.b16 %v315, %v313
      %v334 = vpack.c.b16 %v316, %v314
      %v335 = vpack.c.b16 %v319, %v317
      %v336 = vpack.c.b16 %v320, %v318
      %v371 = vunpack.c.l.b16 %v247
      %v372 = vunpack.c.l.b16 %v248
      %v373 = vunpack.c.l.b16 %v249
      %v374 = vunpack.c.l.b16 %v250
      %v375 = vunpack.c.l.b16 %v251
      %v376 = vunpack.c.l.b16 %v252
      %v377 = vunpack.c.l.b16 %v253
      %v378 = vunpack.c.l.b16 %v254
      %v379 = vunpack.c.l.b16 %v255
      %v380 = vunpack.c.l.b16 %v256
      %v381 = vunpack.c.l.b16 %v257
      %v382 = vunpack.c.l.b16 %v258
      %v383 = vunpack.c.l.b16 %v259
      %v384 = vunpack.c.l.b16 %v260
      %v385 = vunpack.c.l.b16 %v261
      %v386 = vunpack.c.l.b16 %v262
      %v387 = vunpack.c.l.b16 %v263
      %v388 = vunpack.c.l.b16 %v264
      %v389 = vunpack.c.l.b16 %v265
      %v390 = vunpack.c.l.b16 %v266
      %v391 = vunpack.c.l.b16 %v267
      %v392 = vunpack.c.l.b16 %v268
      %v393 = vunpack.c.l.b16 %v269
      %v394 = vunpack.c.l.b16 %v270
      %v395 = vunpack.c.l.b16 %v271
      %v396 = vunpack.c.l.b16 %v272
      %v397 = vpack.c.b16 %v372, %v371
      %v398 = vpack.c.b16 %v374, %v373
      %v399 = vpack.c.b16 %v376, %v375
      %v400 = vpack.c.b16 %v378, %v377
      %v401 = vpack.c.b16 %v380, %v379
      %v402 = vpack.c.b16 %v382, %v381
      %v403 = vpack.c.b16 %v384, %v383
      %v404 = vpack.c.b16 %v386, %v385
      %v405 = vpack.c.b16 %v388, %v387
      %v406 = vpack.c.b16 %v390, %v389
      %v407 = vpack.c.b16 %v392, %v391
      %v408 = vpack.c.b16 %v394, %v393
      %v409 = vpack.c.b16 %v396, %v395
      %vm422 = vcmask 596992
      %v424 = vsel %vm422, %v322, 0
      %v427 = vsel %vm422, %v324, 0
      %v430 = vsel %vm422, %v326, 0
      %v433 = vsel %vm422, %v328, 0
      %v436 = vsel %vm422, %v330, 0
      %v439 = vsel %vm422, %v332, 0
      %v442 = vsel %vm422, %v334, 0
      %v445 = vsel %vm422, %v336, 0
      %vm447 = vcmask 1043456
      %vm448 = vcmask 1044480
      %v449 = vsel %vm447, 4294967295, 65535
      %v450 = vsel %vm448, %v449, 0
      %v452 = vand.u32 %v409, %v450
      %454 = vmatpush.bf16.msra.mxu0 %v404
      %455 = vmatpush.bf16.msra.mxu0 %v403
      %456 = vmatpush.bf16.msra.mxu0 %v402
      %457 = vmatpush.bf16.msra.mxu0 %v401
      %458 = vmatpush.bf16.msra.mxu0 %v400
      %459 = vmatpush.bf16.msra.mxu0 %v399
      %460 = vmatpush.bf16.msra.mxu0 %v398
      %461 = vmatpush.bf16.msra.mxu0 %v397
      %462 = vmatmul.bf16.gmra.mxu0 %v321
      %v463 = vpop.f32.mrf.mxu0
      %v464 = vadd.f32 0.0, %v463
      %v465 = vpop.f32.mrf.mxu0
      %v466 = vadd.f32 0.0, %v465
      %467 = vmatmul.bf16.gmra.mxu0 %v323
      %v468 = vpop.f32.mrf.mxu0
      %v469 = vadd.f32 0.0, %v468
      %v470 = vpop.f32.mrf.mxu0
      %v471 = vadd.f32 0.0, %v470
      %472 = vmatmul.bf16.gmra.mxu0 %v325
      %v473 = vpop.f32.mrf.mxu0
      %v474 = vadd.f32 0.0, %v473
      %v475 = vpop.f32.mrf.mxu0
      %v476 = vadd.f32 0.0, %v475
      %477 = vmatmul.bf16.gmra.mxu0 %v327
      %v478 = vpop.f32.mrf.mxu0
      %v479 = vadd.f32 0.0, %v478
      %v480 = vpop.f32.mrf.mxu0
      %v481 = vadd.f32 0.0, %v480
      %482 = vmatmul.bf16.gmra.mxu0 %v329
      %v483 = vpop.f32.mrf.mxu0
      %v484 = vadd.f32 0.0, %v483
      %v485 = vpop.f32.mrf.mxu0
      %v486 = vadd.f32 0.0, %v485
      %487 = vmatmul.bf16.gmra.mxu0 %v331
      %v488 = vpop.f32.mrf.mxu0
      %v489 = vadd.f32 0.0, %v488
      %v490 = vpop.f32.mrf.mxu0
      %v491 = vadd.f32 0.0, %v490
      %492 = vmatmul.bf16.gmra.mxu0 %v333
      %v493 = vpop.f32.mrf.mxu0
      %v494 = vadd.f32 0.0, %v493
      %v495 = vpop.f32.mrf.mxu0
      %v496 = vadd.f32 0.0, %v495
      %497 = vmatmul.bf16.gmra.mxu0 %v335
      %v498 = vpop.f32.mrf.mxu0
      %v499 = vadd.f32 0.0, %v498
      %v500 = vpop.f32.mrf.mxu0
      %v501 = vadd.f32 0.0, %v500
      %502 = vdwg.mxu0
      %503 = vmatpush.bf16.msra.mxu0 0
      %504 = vmatpush.bf16.msra.mxu0 0
      %505 = vmatpush.bf16.msra.mxu0 0
      %506 = vmatpush.bf16.msra.mxu0 %v452
      %507 = vmatpush.bf16.msra.mxu0 %v408
      %508 = vmatpush.bf16.msra.mxu0 %v407
      %509 = vmatpush.bf16.msra.mxu0 %v406
      %510 = vmatpush.bf16.msra.mxu0 %v405
      %511 = vmatmul.bf16.gmra.mxu0 %v424
      %v512 = vpop.f32.mrf.mxu0
      %v513 = vadd.f32 %v464, %v512
      %v514 = vpop.f32.mrf.mxu0
      %v515 = vadd.f32 %v466, %v514
      %516 = vmatmul.bf16.gmra.mxu0 %v427
      %v517 = vpop.f32.mrf.mxu0
      %v518 = vadd.f32 %v469, %v517
      %v519 = vpop.f32.mrf.mxu0
      %v520 = vadd.f32 %v471, %v519
      %521 = vmatmul.bf16.gmra.mxu0 %v430
      %v522 = vpop.f32.mrf.mxu0
      %v523 = vadd.f32 %v474, %v522
      %v524 = vpop.f32.mrf.mxu0
      %v525 = vadd.f32 %v476, %v524
      %526 = vmatmul.bf16.gmra.mxu0 %v433
      %v527 = vpop.f32.mrf.mxu0
      %v528 = vadd.f32 %v479, %v527
      %v529 = vpop.f32.mrf.mxu0
      %v530 = vadd.f32 %v481, %v529
      %531 = vmatmul.bf16.gmra.mxu0 %v436
      %v532 = vpop.f32.mrf.mxu0
      %v533 = vadd.f32 %v484, %v532
      %v534 = vpop.f32.mrf.mxu0
      %v535 = vadd.f32 %v486, %v534
      %536 = vmatmul.bf16.gmra.mxu0 %v439
      %v537 = vpop.f32.mrf.mxu0
      %v538 = vadd.f32 %v489, %v537
      %v539 = vpop.f32.mrf.mxu0
      %v540 = vadd.f32 %v491, %v539
      %541 = vmatmul.bf16.gmra.mxu0 %v442
      %v542 = vpop.f32.mrf.mxu0
      %v543 = vadd.f32 %v494, %v542
      %v544 = vpop.f32.mrf.mxu0
      %v545 = vadd.f32 %v496, %v544
      %546 = vmatmul.bf16.gmra.mxu0 %v445
      %v547 = vpop.f32.mrf.mxu0
      %v548 = vadd.f32 %v499, %v547
      %v549 = vpop.f32.mrf.mxu0
      %v550 = vadd.f32 %v501, %v549
      %551 = vdwg.mxu0
      %v552 = vmax.f32 %v513, 1e-10
      %v553 = vmax.f32 %v515, 1e-10
      %v554 = vmax.f32 %v518, 1e-10
      %v555 = vmax.f32 %v520, 1e-10
      %v556 = vmax.f32 %v523, 1e-10
      %v557 = vmax.f32 %v525, 1e-10
      %v558 = vmax.f32 %v528, 1e-10
      %v559 = vmax.f32 %v530, 1e-10
      %v560 = vmax.f32 %v533, 1e-10
      %v561 = vmax.f32 %v535, 1e-10
      %v562 = vmax.f32 %v538, 1e-10
      %v563 = vmax.f32 %v540, 1e-10
      %v564 = vmax.f32 %v543, 1e-10
      %v565 = vmax.f32 %v545, 1e-10
      %v566 = vmax.f32 %v548, 1e-10
      %v567 = vmax.f32 %v550, 1e-10
      %v568 = vlog2.pop %v552
      %v569 = vmul.f32 %v568, 0.6931472
      %v570 = vlog2.pop %v553
      %v571 = vmul.f32 %v570, 0.6931472
      %v572 = vlog2.pop %v554
      %v573 = vmul.f32 %v572, 0.6931472
      %v574 = vlog2.pop %v555
      %v575 = vmul.f32 %v574, 0.6931472
      %v576 = vlog2.pop %v556
      %v577 = vmul.f32 %v576, 0.6931472
      %v578 = vlog2.pop %v557
      %v579 = vmul.f32 %v578, 0.6931472
      %v580 = vlog2.pop %v558
      %v581 = vmul.f32 %v580, 0.6931472
      %v582 = vlog2.pop %v559
      %v583 = vmul.f32 %v582, 0.6931472
      %v584 = vlog2.pop %v560
      %v585 = vmul.f32 %v584, 0.6931472
      %v586 = vlog2.pop %v561
      %v587 = vmul.f32 %v586, 0.6931472
      %v588 = vlog2.pop %v562
      %v589 = vmul.f32 %v588, 0.6931472
      %v590 = vlog2.pop %v563
      %v591 = vmul.f32 %v590, 0.6931472
      %v592 = vlog2.pop %v564
      %v593 = vmul.f32 %v592, 0.6931472
      %v594 = vlog2.pop %v565
      %v595 = vmul.f32 %v594, 0.6931472
      %v596 = vlog2.pop %v566
      %v597 = vmul.f32 %v596, 0.6931472
      %v598 = vlog2.pop %v567
      %v599 = vmul.f32 %v598, 0.6931472
      %v600 = vmul.f32 %v569, 0.4342945
      %v601 = vmul.f32 %v571, 0.4342945
      %v602 = vmul.f32 %v573, 0.4342945
      %v603 = vmul.f32 %v575, 0.4342945
      %v604 = vmul.f32 %v577, 0.4342945
      %v605 = vmul.f32 %v579, 0.4342945
      %v606 = vmul.f32 %v581, 0.4342945
      %v607 = vmul.f32 %v583, 0.4342945
      %v608 = vmul.f32 %v585, 0.4342945
      %v609 = vmul.f32 %v587, 0.4342945
      %v610 = vmul.f32 %v589, 0.4342945
      %v611 = vmul.f32 %v591, 0.4342945
      %v612 = vmul.f32 %v593, 0.4342945
      %v613 = vmul.f32 %v595, 0.4342945
      %v614 = vmul.f32 %v597, 0.4342945
      %v615 = vmul.f32 %v599, 0.4342945
      %v616 = vmul.f32 %v600, 10.0
      %v617 = vmul.f32 %v601, 10.0
      %v618 = vmul.f32 %v602, 10.0
      %v619 = vmul.f32 %v603, 10.0
      %v620 = vmul.f32 %v604, 10.0
      %v621 = vmul.f32 %v605, 10.0
      %v622 = vmul.f32 %v606, 10.0
      %v623 = vmul.f32 %v607, 10.0
      %v624 = vmul.f32 %v608, 10.0
      %v625 = vmul.f32 %v609, 10.0
      %v626 = vmul.f32 %v610, 10.0
      %v627 = vmul.f32 %v611, 10.0
      %v628 = vmul.f32 %v612, 10.0
      %v629 = vmul.f32 %v613, 10.0
      %v630 = vmul.f32 %v614, 10.0
      %v631 = vmul.f32 %v615, 10.0
      %s632 = sld [smem:[#allocation2]]
      %v633 = vstv %s632
      %v634 = vmax.f32 %v616, %v633
      %v635 = vmax.f32 %v617, %v633
      %v636 = vmax.f32 %v618, %v633
      %v637 = vmax.f32 %v619, %v633
      %v638 = vmax.f32 %v620, %v633
      %v639 = vmax.f32 %v621, %v633
      %v640 = vmax.f32 %v622, %v633
      %v641 = vmax.f32 %v623, %v633
      %v642 = vmax.f32 %v624, %v633
      %v643 = vmax.f32 %v625, %v633
      %v644 = vmax.f32 %v626, %v633
      %v645 = vmax.f32 %v627, %v633
      %v646 = vmax.f32 %v628, %v633
      %v647 = vmax.f32 %v629, %v633
      %v648 = vmax.f32 %v630, %v633
      %v649 = vmax.f32 %v631, %v633
      %v650 = vld [vmem:[%s1] sm:$0xff]
      %v651 = vld [vmem:[%s1 + $0x8] sm:$0xff]
      %v652 = vld [vmem:[%s1 + $0x10] sm:$0xff]
      %v653 = vld [vmem:[%s1 + $0x18] sm:$0xff]
      %v654 = vld [vmem:[%s1 + $0x20] sm:$0xff]
      %655 = vmatpush.msra.mxu0 %v649
      %656 = vmatpush.msra.mxu0 %v648
      %657 = vmatpush.msra.mxu0 %v647
      %658 = vmatpush.msra.mxu0 %v646
      %659 = vmatpush.msra.mxu0 %v645
      %660 = vmatpush.msra.mxu0 %v644
      %661 = vmatpush.msra.mxu0 %v643
      %662 = vmatpush.msra.mxu0 %v642
      %663 = vmatpush.msra.mxu0 %v641
      %664 = vmatpush.msra.mxu0 %v640
      %665 = vmatpush.msra.mxu0 %v639
      %666 = vmatpush.msra.mxu0 %v638
      %667 = vmatpush.msra.mxu0 %v637
      %668 = vmatpush.msra.mxu0 %v636
      %669 = vmatpush.msra.mxu0 %v635
      %670 = vmatpush.msra.mxu0 %v634
      %671 = vmatmul.f32.gmra.mxu0 %v650
      %v672 = vpop.f32.mrf.mxu0
      %v673 = vadd.f32 0.0, %v672
      %674 = vmatmul.f32.gmra.mxu0 %v651
      %v675 = vpop.f32.mrf.mxu0
      %v676 = vadd.f32 0.0, %v675
      %677 = vmatmul.f32.gmra.mxu0 %v652
      %v678 = vpop.f32.mrf.mxu0
      %v679 = vadd.f32 0.0, %v678
      %680 = vmatmul.f32.gmra.mxu0 %v653
      %v681 = vpop.f32.mrf.mxu0
      %v682 = vadd.f32 0.0, %v681
      %683 = vmatmul.f32.gmra.mxu0 %v654
      %v684 = vpop.f32.mrf.mxu0
      %v685 = vadd.f32 0.0, %v684
      %686 = vdwg.mxu0
      %vm687 = vcmask 171008
      %688 = vst.msk [vmem:[%s229] sm:$0xff] %vm687, %v673
      %689 = vst.msk [vmem:[%s229 + $0x8] sm:$0xff] %vm687, %v676
      %690 = vst.msk [vmem:[%s229 + $0x10] sm:$0xff] %vm687, %v679
      %691 = vst.msk [vmem:[%s229 + $0x18] sm:$0xff] %vm687, %v682
      %692 = vst.msk [vmem:[%s229 + $0x20] sm:$0xff] %vm687, %v685
      %p693 = scmp.lt.s32.totalorder %s20, 1
      %s694 = scalar_select %p693, %s20, 1
      %p695 = scmp.lt.s32.totalorder %s21, 0
      %s696 = scalar_select %p695, %s21, 0
      %s697 = smul.addr %s694, 5
      %s698 = sadd.s32 %s696, %s697
      %s699 = smul.addr %s698, 8
      %s700 = scalar_lea.vmem %s4, %s699
      // Predicated region
      $region37: #{_forward.3} parent=35 // pred_check
        %p701 = pneg %p139
      $region38: #{_forward.3} parent=35 // pred_check_branch
        %703 = sbr.rel (%p701) target = $region40
      $region39: #{_forward.3} parent=35 // pred_region
        _
      $region40: #{_forward.3} parent=35 // pred_fallthru
        _
    $region36: #{_forward.3} parent=5 // pred_fallthru
      _
    %p704 = scmp.le.s32.totalorder 2, %s11
    // Predicated region
    $region41: #{_forward.3} parent=5 // pred_check
      %p705 = pneg %p704
    $region42: #{_forward.3} parent=5 // pred_check_branch
      %707 = sbr.rel (%p705) target = $region44
    $region43: #{_forward.3} parent=5 // pred_region
      %s708 = ssub.s32 %s11, 2
      // Predicated region
      $region45: #{_forward.3} parent=43 // pred_check
        %p709 = pneg %p145
      $region46: #{_forward.3} parent=43 // pred_check_branch
        %711 = sbr.rel (%p709) target = $region48
      $region47: #{_forward.3} parent=43 // pred_region
        %p712 = scmp.lt.s32.totalorder %s22, 1
        %s713 = scalar_select %p712, %s22, 1
        %p714 = scmp.lt.s32.totalorder %s23, 0
        %s715 = scalar_select %p714, %s23, 0
        %s716 = smul.addr %s713, 5
        %s717 = sadd.s32 %s715, %s716
        %s718 = smul.addr %s717, 8
        %s719 = scalar_lea.vmem %s4, %s718
      $region48: #{_forward.3} parent=43 // pred_fallthru
        _
    $region44: #{_forward.3} parent=5 // pred_fallthru
      _
  $region6: #{_forward.3} parent=0 // loop_footer
    %s15 = sadd.s32 1, %s11
  $region7: #{_forward.3} parent=0 // loop_footer_branch
    %10 = sbr.rel target = $region3
  $region8: #{_forward.3} parent=0 // loop_exit
    _

</llo_original>
